<compile_context>
chip_gen: v7x
topology: tpu7x:2x2x1
jax: 0.10.0
libtpu: 0.0.40
codegen_flags: <defaults>
</compile_context>

<pallas_src>
import jax
import jax.numpy as jnp
from jax import lax
from jax.experimental import pallas as pl
from jax.experimental.pallas import tpu as pltpu


def _round_up(x, m):
    return (x + m - 1) // m * m


def gcl_kernel(x_ref, rc_ref, rowl_ref, eb_ref,
               w1s_ref, w1t_ref, w2_ref, b2_ref,
               w3_ref, b3_ref, w4_ref, b4_ref,
               out_x_ref, out_e_ref,
               xw_ref, agg_ref):
    e = pl.program_id(1)
    NB = x_ref.shape[1]          # nodes per graph-block (sublane-padded)
    TE = rc_ref.shape[1]         # edges per tile

    # ---- once per graph-block: zero the segment-sum accumulator and precompute the
    # reassociated gather table xw = [x @ w1s ; x @ w1t] (bf16). ----
    @pl.when(e == 0)
    def _():
        agg_ref[...] = jnp.zeros_like(agg_ref)
        x_bf = x_ref[0].astype(jnp.bfloat16)
        xw_s = jnp.dot(x_bf, w1s_ref[...], preferred_element_type=jnp.float32)
        xw_t = jnp.dot(x_bf, w1t_ref[...], preferred_element_type=jnp.float32)
        xw_ref[...] = jnp.concatenate([xw_s, xw_t], axis=0).astype(jnp.bfloat16)

    # ---- per edge tile ----
    rc = rc_ref[0]                               # (TE, 2) int32, column-oriented
    row_c = rc[:, 0:1]                           # (TE, 1)
    col_c = rc[:, 1:2]                           # (TE, 1)

    # Fused gather one-hot [row_oh | col_oh] : (TE, 2*NB).  Padded edges carry the
    # sentinel id NB -> no lane matches -> all-zero row -> inert.
    iota2 = lax.broadcasted_iota(jnp.int32, (TE, 2 * NB), 1)
    tgt = jnp.where(iota2 < NB, row_c, col_c + NB)
    oh_cat = (iota2 == tgt).astype(jnp.bfloat16)

    # Edge MLP.  eb == edge_attr @ w1e + b1, precomputed in the wrapper (bf16 stream).
    h1 = (jnp.dot(oh_cat, xw_ref[...], preferred_element_type=jnp.float32)
          + eb_ref[0].astype(jnp.float32))
    h1 = jnp.maximum(h1, 0.0)
    ef = jnp.maximum(
        jnp.dot(h1.astype(jnp.bfloat16), w2_ref[...],
                preferred_element_type=jnp.float32) + b2_ref[...], 0.0)   # (TE, H) f32

    ef_bf = ef.astype(jnp.bfloat16)
    out_e_ref[0] = ef_bf                                                  # bf16 store

    # Segment sum over this tile: agg += row_oh^T @ ef.  The one-hot is built directly
    # in (NB, TE) orientation from the lane-major row stream -> straight MXU feed.
    row_lane = rowl_ref[0, 0]                    # (1, TE) int32, lane-major
    iota_n = lax.broadcasted_iota(jnp.int32, (NB, TE), 0)
    row_ohT = (iota_n == row_lane).astype(jnp.bfloat16)
    agg_ref[...] += jnp.dot(row_ohT, ef_bf, preferred_element_type=jnp.float32)

    # ---- after the last edge tile of this graph-block: node MLP + residual ----
    @pl.when(e == pl.num_programs(1) - 1)
    def _():
        x_f32 = x_ref[0]
        x_bf = x_f32.astype(jnp.bfloat16)
        agg_bf = agg_ref[...].astype(jnp.bfloat16)
        nh = jnp.concatenate([x_bf, agg_bf], axis=1)          # (NB, 2H)
        n1 = jnp.maximum(
            jnp.dot(nh, w3_ref[...], preferred_element_type=jnp.float32) + b3_ref[...],
            0.0)
        n2 = (jnp.dot(n1.astype(jnp.bfloat16), w4_ref[...],
                      preferred_element_type=jnp.float32) + b4_ref[...])
        out_x_ref[0] = x_f32 + n2                              # recurrent residual


def gcl_forward(x, row, col, edge_attr, params, *, batch, n_nodes,
                edge_tile=None, graphs_per_block=None, validate_indices=True):
    N, H = x.shape
    assert N == batch * n_nodes
    E = row.shape[0]
    assert E % batch == 0, "edges must be grouped contiguously per graph"
    e_per_g = E // batch

    # --- graph grouping: G graphs per grid block (raises one-hot contraction depth) ---
    if graphs_per_block is None:
        G = 1
        for cand in range(1, batch + 1):
            if batch % cand:
                continue
            if cand * n_nodes > 128:          # enough MXU depth; stop growing
                break
            if batch // cand < min(2, batch):  # keep >=2 parallel blocks (v7x: 2 TCs)
                break
            G = cand
    else:
        G = int(graphs_per_block)
        assert batch % G == 0
    n_blk = batch // G
    nb0 = G * n_nodes                    # real nodes per block
    NB = _round_up(nb0, 8)               # sublane-aligned nodes per block
    e_blk = G * e_per_g                  # real edges per block

    # --- local (per-block) node ids; edges never cross blocks ---
    offs = (jnp.arange(n_blk, dtype=jnp.int32) * nb0)[:, None]
    row_l = row.astype(jnp.int32).reshape(n_blk, e_blk) - offs
    col_l = col.astype(jnp.int32).reshape(n_blk, e_blk) - offs
    if validate_indices:
        try:
            ok = bool(jnp.all((row_l >= 0) & (row_l < nb0)
                              & (col_l >= 0) & (col_l < nb0)))
            if not ok:
                raise ValueError("edge indices not grouped per graph / out of range")
        except jax.errors.ConcretizationTypeError:
            pass  # under jit: skip host-side validation

    # --- fold the narrow edge_attr matmul + b1 into a bf16 per-edge bias ---
    if edge_attr is None:
        eb_full = jnp.broadcast_to(params["b1"].astype(jnp.float32), (E, H))
    else:
        eb_full = (edge_attr.astype(jnp.float32) @ params["w1e"].astype(jnp.float32)
                   + params["b1"].astype(jnp.float32))
    eb = eb_full.astype(jnp.bfloat16).reshape(n_blk, e_blk, H)

    # --- chip-aware VMEM budget and edge-tile selection ---
    try:
        info = pltpu.get_tpu_info()
        vmem_cap = int(getattr(info, "vmem_capacity_bytes", 64 * 1024 * 1024))
    except Exception:
        vmem_cap = 64 * 1024 * 1024                          # conservative (v7x per-core)
    vmem_limit = max(32 * 1024 * 1024, min(int(0.75 * vmem_cap), 100 * 1024 * 1024))

    def _per_edge_bytes():
        onehots = _round_up(2 * NB, 128) * 2 + _round_up(NB, 16) * 2      # bf16 one-hots
        blocks = (128 * 4 + 8 * 4 + 128 * 2 + 128 * 2) * 2               # rc/rowl/eb/out_e x2buf
        temps = 128 * 4 * 3                                               # h1/ef f32 temps
        return onehots + blocks + temps

    fixed = (3 * NB * 128 * 4      # x block, agg scratch, out_x block (f32, lane-padded)
             + 2 * NB * 128 * 2    # xw scratch (bf16)
             + 64 * 1024)          # weights + slack
    if edge_tile is None:
        budget = max(vmem_limit // 2 - fixed, 0)
        te = int(budget // max(_per_edge_bytes(), 1))
        te = max(128, min(te, 2048))
    else:
        te = int(edge_tile)
    TE = max(8, _round_up(min(te, _round_up(e_blk, 8)), 8))
    e_pad = _round_up(e_blk, TE)
    n_e_tiles = e_pad // TE

    pad = e_pad - e_blk
    if pad:
        # Sentinel node id == NB -> all-zero one-hot row -> padded edges are inert.
        row_l = jnp.pad(row_l, ((0, 0), (0, pad)), constant_values=NB)
        col_l = jnp.pad(col_l, ((0, 0), (0, pad)), constant_values=NB)
        eb = jnp.pad(eb, ((0, 0), (0, pad), (0, 0)))

    rc_col = jnp.stack([row_l, col_l], axis=-1)              # (n_blk, e_pad, 2) columns
    row_lane = row_l.reshape(n_blk, n_e_tiles, 1, TE)        # lane-major row stream

    xg = x.astype(jnp.float32).reshape(n_blk, nb0, H)
    if NB != nb0:
        xg = jnp.pad(xg, ((0, 0), (0, NB - nb0), (0, 0)))

    bf16 = lambda a: jnp.asarray(a, jnp.bfloat16)
    f32 = lambda a: jnp.asarray(a, jnp.float32)
    w1s, w1t, w2 = bf16(params["w1s"]), bf16(params["w1t"]), bf16(params["w2"])
    w3 = bf16(jnp.concatenate([params["w3h"], params["w3a"]], axis=0))   # fused (2H, H)
    w4 = bf16(params["w4"])
    b2, b3, b4 = f32(params["b2"]), f32(params["b3"]), f32(params["b4"])

    const2 = lambda b, e: (0, 0)
    grid = (n_blk, n_e_tiles)
    in_specs = [
        pl.BlockSpec((1, NB, H), lambda b, e: (b, 0, 0)),          # x (resident per block)
        pl.BlockSpec((1, TE, 2), lambda b, e: (b, e, 0)),          # row/col, column-oriented
        pl.BlockSpec((1, 1, 1, TE), lambda b, e: (b, e, 0, 0)),    # row, lane-major
        pl.BlockSpec((1, TE, H), lambda b, e: (b, e, 0)),          # eb (bf16)
        pl.BlockSpec((H, H), const2),                              # w1s
        pl.BlockSpec((H, H), const2),                              # w1t
        pl.BlockSpec((H, H), const2),                              # w2
        pl.BlockSpec((1, H), const2),                              # b2
        pl.BlockSpec((2 * H, H), const2),                          # w3 = [w3h; w3a]
        pl.BlockSpec((1, H), const2),                              # b3
        pl.BlockSpec((H, H), const2),                              # w4
        pl.BlockSpec((1, H), const2),                              # b4
    ]
    out_specs = (
        pl.BlockSpec((1, NB, H), lambda b, e: (b, 0, 0)),          # x_out (written at last e)
        pl.BlockSpec((1, TE, H), lambda b, e: (b, e, 0)),          # edge_feat (bf16)
    )
    out_shape = (jax.ShapeDtypeStruct((n_blk, NB, H), jnp.float32),
                 jax.ShapeDtypeStruct((n_blk, e_pad, H), jnp.bfloat16))

    flops = 2 * n_blk * (
        2 * NB * H * H                    # xw precompute (per block)
        + e_pad * (2 * NB) * H            # fused gather
        + e_pad * H * H                   # second edge linear
        + e_pad * NB * H                  # segment-sum scatter
        + NB * (2 * H) * H + NB * H * H)  # node MLP
    bytes_accessed = int(
        xg.size * 4 + rc_col.size * 4 + row_lane.size * 4 + eb.size * 2
        + (w1s.size + w1t.size + w2.size + w3.size + w4.size) * 2
        + (b2.size + b3.size + b4.size) * 4
        + n_blk * NB * H * 4 + n_blk * e_pad * H * 2)

    fn = pl.pallas_call(
        gcl_kernel,
        out_shape=out_shape,
        grid_spec=pltpu.PrefetchScalarGridSpec(
            num_scalar_prefetch=0,
            grid=grid,
            in_specs=in_specs,
            out_specs=out_specs,
            scratch_shapes=[pltpu.VMEM((2 * NB, H), jnp.bfloat16),   # xw = [x@w1s ; x@w1t]
                            pltpu.VMEM((NB, H), jnp.float32)],       # segment-sum accumulator
        ),
        compiler_params=pltpu.CompilerParams(
            dimension_semantics=("parallel", "arbitrary"),
            vmem_limit_bytes=int(vmem_limit),
        ),
        cost_estimate=pl.CostEstimate(flops=int(flops), transcendentals=0,
                                      bytes_accessed=bytes_accessed),
    )
    out_x, out_e = fn(xg, rc_col, row_lane, eb,
                      w1s, w1t, w2, b2, w3, b3, w4, b4)
    x_out = out_x[:, :nb0, :].reshape(N, H)
    edge_feat = out_e[:, :e_blk, :].astype(jnp.float32).reshape(E, H)
    return x_out, edge_feat


def gcl_reference(x, row, col, edge_attr, params):
    """Pure-JAX f32 reference of the same forward pass."""
    xs, xt = x[row], x[col]
    w1 = jnp.concatenate([params["w1s"], params["w1t"], params["w1e"]], axis=0)
    edge_in = jnp.concatenate([xs, xt, edge_attr], axis=1)
    h1 = jax.nn.relu(edge_in @ w1 + params["b1"])
    ef = jax.nn.relu(h1 @ params["w2"] + params["b2"])
    agg = jax.ops.segment_sum(ef, row, num_segments=x.shape[0])
    w3 = jnp.concatenate([params["w3h"], params["w3a"]], axis=0)
    n1 = jax.nn.relu(jnp.concatenate([x, agg], axis=1) @ w3 + params["b3"])
    out = x + n1 @ params["w4"] + params["b4"]
    return out, ef


if __name__ == "__main__":
    batch, n_nodes, hidden, ea_dim = 2, 8, 32, 2
    N = batch * n_nodes

    # Fully connected (no self loops) per graph, batched with node-index offsets.
    rows, cols = [], []
    for b in range(batch):
        for i in range(n_nodes):
            for j in range(n_nodes):
                if i != j:
                    rows.append(b * n_nodes + i)
                    cols.append(b * n_nodes + j)
    row = jnp.asarray(rows, dtype=jnp.int32)
    col = jnp.asarray(cols, dtype=jnp.int32)
    E = row.shape[0]

    key = jax.random.PRNGKey(0)
    ks = jax.random.split(key, 12)
    x = jax.random.normal(ks[0], (N, hidden), jnp.float32)
    edge_attr = jax.random.normal(ks[1], (E, ea_dim), jnp.float32)

    s_in = 1.0 / jnp.sqrt(2 * hidden + ea_dim)
    s_h = 1.0 / jnp.sqrt(hidden)
    params = {
        # edge MLP: Linear(2*hidden + ea_dim -> hidden), ReLU, Linear(hidden -> hidden), ReLU
        "w1s": jax.random.normal(ks[2], (hidden, hidden), jnp.float32) * s_in,
        "w1t": jax.random.normal(ks[3], (hidden, hidden), jnp.float32) * s_in,
        "w1e": jax.random.normal(ks[4], (ea_dim, hidden), jnp.float32) * s_in,
        "b1":  jax.random.normal(ks[5], (1, hidden), jnp.float32) * s_in,
        "w2":  jax.random.normal(ks[6], (hidden, hidden), jnp.float32) * s_h,
        "b2":  jax.random.normal(ks[7], (1, hidden), jnp.float32) * s_h,
        # node MLP: Linear(2*hidden -> hidden), ReLU, Linear(hidden -> hidden)
        "w3h": jax.random.normal(ks[8], (hidden, hidden), jnp.float32) * s_h,
        "w3a": jax.random.normal(ks[9], (hidden, hidden), jnp.float32) * s_h,
        "b3":  jax.random.normal(ks[10], (1, hidden), jnp.float32) * s_h,
        "w4":  jax.random.normal(ks[11], (hidden, hidden), jnp.float32) * s_h,
        "b4":  jnp.zeros((1, hidden), jnp.float32),
    }

    x_ref, e_ref = gcl_reference(x, row, col, edge_attr, params)

    # Run 1: default grouping (2 parallel graph blocks), edge_tile=32 -> 2 edge tiles
    # per block, exercising the VMEM agg accumulator and padded-edge masking paths.
    x1, e1 = jax.block_until_ready(
        gcl_forward(x, row, col, edge_attr, params,
                    batch=batch, n_nodes=n_nodes, edge_tile=32))
    assert x1.shape == (N, hidden) and e1.shape == (E, hidden)
    assert jnp.allclose(x1, x_ref, rtol=5e-2, atol=5e-2)
    assert jnp.allclose(e1, e_ref, rtol=5e-2, atol=5e-2)

    # Run 2: graph grouping (both graphs in one block -> doubled one-hot contraction
    # depth), still 2 edge tiles per block.
    x2, e2 = jax.block_until_ready(
        gcl_forward(x, row, col, edge_attr, params,
                    batch=batch, n_nodes=n_nodes, edge_tile=64, graphs_per_block=2))
    assert jnp.allclose(x2, x_ref, rtol=5e-2, atol=5e-2)
    assert jnp.allclose(e2, e_ref, rtol=5e-2, atol=5e-2)

    print("KERNEL_OK")
</pallas_src>

<mosaic_0001>
module attributes {stable_mosaic.version = 11 : i64} {
  func.func @gcl_kernel(%arg0: i32, %arg1: i32, %arg2: memref<1x8x32xf32, #tpu.memory_space<vmem>>, %arg3: memref<1x32x2xi32, #tpu.memory_space<vmem>>, %arg4: memref<1x1x1x32xi32, #tpu.memory_space<vmem>>, %arg5: memref<1x32x32xbf16, #tpu.memory_space<vmem>>, %arg6: memref<32x32xbf16, #tpu.memory_space<vmem>>, %arg7: memref<32x32xbf16, #tpu.memory_space<vmem>>, %arg8: memref<32x32xbf16, #tpu.memory_space<vmem>>, %arg9: memref<1x32xf32, #tpu.memory_space<vmem>>, %arg10: memref<64x32xbf16, #tpu.memory_space<vmem>>, %arg11: memref<1x32xf32, #tpu.memory_space<vmem>>, %arg12: memref<32x32xbf16, #tpu.memory_space<vmem>>, %arg13: memref<1x32xf32, #tpu.memory_space<vmem>>, %arg14: memref<1x8x32xf32, #tpu.memory_space<vmem>>, %arg15: memref<1x32x32xbf16, #tpu.memory_space<vmem>>, %arg16: memref<16x32xbf16, #tpu.memory_space<vmem>>, %arg17: memref<8x32xf32, #tpu.memory_space<vmem>>) attributes {dimension_semantics = [#tpu.dimension_semantics<parallel>, #tpu.dimension_semantics<arbitrary>], iteration_bounds = array<i64: 2, 2>, scalar_prefetch = 0 : i64, scratch_operands = 2 : i64, tpu.core_type = #tpu.core_type<tc>, window_params = [{transform_indices = @transform_0, window_bounds = array<i64: 1, 8, 32>}, {transform_indices = @transform_1, window_bounds = array<i64: 1, 32, 2>}, {transform_indices = @transform_2, window_bounds = array<i64: 1, 1, 1, 32>}, {transform_indices = @transform_3, window_bounds = array<i64: 1, 32, 32>}, {pipeline_mode = #tpu.pipeline_mode<synchronous>, transform_indices = @transform_4, window_bounds = array<i64: 32, 32>}, {pipeline_mode = #tpu.pipeline_mode<synchronous>, transform_indices = @transform_5, window_bounds = array<i64: 32, 32>}, {pipeline_mode = #tpu.pipeline_mode<synchronous>, transform_indices = @transform_6, window_bounds = array<i64: 32, 32>}, {pipeline_mode = #tpu.pipeline_mode<synchronous>, transform_indices = @transform_7, window_bounds = array<i64: 1, 32>}, {pipeline_mode = #tpu.pipeline_mode<synchronous>, transform_indices = @transform_8, window_bounds = array<i64: 64, 32>}, {pipeline_mode = #tpu.pipeline_mode<synchronous>, transform_indices = @transform_9, window_bounds = array<i64: 1, 32>}, {pipeline_mode = #tpu.pipeline_mode<synchronous>, transform_indices = @transform_10, window_bounds = array<i64: 32, 32>}, {pipeline_mode = #tpu.pipeline_mode<synchronous>, transform_indices = @transform_11, window_bounds = array<i64: 1, 32>}, {transform_indices = @transform_12, window_bounds = array<i64: 1, 8, 32>}, {transform_indices = @transform_13, window_bounds = array<i64: 1, 32, 32>}]} {
    %c0_i32 = arith.constant 0 : i32
    %0 = arith.cmpi eq, %arg1, %c0_i32 : i32
    %1 = arith.extui %0 : i1 to i32
    %c0_i32_0 = arith.constant 0 : i32
    %2 = arith.cmpi ne, %1, %c0_i32_0 : i32
    scf.if %2 {
      %cst_29 = arith.constant 0.000000e+00 : f32
      %56 = vector.broadcast %cst_29 : f32 to vector<8x32xf32>
      %c0_30 = arith.constant 0 : index
      %c0_31 = arith.constant 0 : index
      %57 = vector.load %arg17[%c0_30, %c0_31] : memref<8x32xf32, #tpu.memory_space<vmem>>, vector<8x32xf32>
      tpu.vector_store %arg17[%c0_30, %c0_31], %56 {strides = array<i32>} : memref<8x32xf32, #tpu.memory_space<vmem>>, vector<8x32xf32>,
      %c0_32 = arith.constant 0 : index
      %c0_33 = arith.constant 0 : index
      %c0_34 = arith.constant 0 : index
      %58 = vector.load %arg2[%c0_32, %c0_33, %c0_34] : memref<1x8x32xf32, #tpu.memory_space<vmem>>, vector<1x8x32xf32>
      %59 = vector.shape_cast %58 : vector<1x8x32xf32> to vector<8x32xf32>
      %60 = arith.truncf %59 : vector<8x32xf32> to vector<8x32xbf16>
      %c0_35 = arith.constant 0 : index
      %c0_36 = arith.constant 0 : index
      %61 = vector.load %arg6[%c0_35, %c0_36] : memref<32x32xbf16, #tpu.memory_space<vmem>>, vector<32x32xbf16>
      %cst_37 = arith.constant dense<0.000000e+00> : vector<8x32xf32>
      %62 = tpu.matmul %60, %61, %cst_37 {dimension_numbers = #tpu.dot_dimension_numbers<[1], [0], [0], [1], [0, 0, 1, 1], [], []>} : vector<8x32xbf16>, vector<32x32xbf16>, vector<8x32xf32> -> vector<8x32xf32>
      %c0_38 = arith.constant 0 : index
      %c0_39 = arith.constant 0 : index
      %63 = vector.load %arg7[%c0_38, %c0_39] : memref<32x32xbf16, #tpu.memory_space<vmem>>, vector<32x32xbf16>
      %cst_40 = arith.constant dense<0.000000e+00> : vector<8x32xf32>
      %64 = tpu.matmul %60, %63, %cst_40 {dimension_numbers = #tpu.dot_dimension_numbers<[1], [0], [0], [1], [0, 0, 1, 1], [], []>} : vector<8x32xbf16>, vector<32x32xbf16>, vector<8x32xf32> -> vector<8x32xf32>
      %65 = tpu.concatenate %62, %64 in 0 : vector<8x32xf32>, vector<8x32xf32> -> vector<16x32xf32>
      %66 = arith.truncf %65 : vector<16x32xf32> to vector<16x32xbf16>
      %c0_41 = arith.constant 0 : index
      %c0_42 = arith.constant 0 : index
      %67 = vector.load %arg16[%c0_41, %c0_42] : memref<16x32xbf16, #tpu.memory_space<vmem>>, vector<16x32xbf16>
      tpu.vector_store %arg16[%c0_41, %c0_42], %66 {strides = array<i32>} : memref<16x32xbf16, #tpu.memory_space<vmem>>, vector<16x32xbf16>,
    } else {
    }
    %c0 = arith.constant 0 : index
    %c0_1 = arith.constant 0 : index
    %c0_2 = arith.constant 0 : index
    %3 = vector.load %arg3[%c0, %c0_1, %c0_2] : memref<1x32x2xi32, #tpu.memory_space<vmem>>, vector<1x32x2xi32>
    %4 = vector.shape_cast %3 : vector<1x32x2xi32> to vector<32x2xi32>
    %5 = vector.extract_strided_slice %4 {offsets = [0, 0], sizes = [32, 1], strides = [1, 1]} : vector<32x2xi32> to vector<32x1xi32>
    %6 = vector.extract_strided_slice %4 {offsets = [0, 1], sizes = [32, 1], strides = [1, 1]} : vector<32x2xi32> to vector<32x1xi32>
    %7 = tpu.iota {dimensions = array<i32: 1>} : vector<32x16xi32>
    %c8_i32 = arith.constant 8 : i32
    %8 = vector.broadcast %c8_i32 : i32 to vector<32x16xi32>
    %9 = arith.cmpi slt, %7, %8 : vector<32x16xi32>
    %c8_i32_3 = arith.constant 8 : i32
    %10 = vector.broadcast %c8_i32_3 : i32 to vector<32x1xi32>
    %11 = arith.addi %6, %10 : vector<32x1xi32>
    %12 = vector.shape_cast %5 : vector<32x1xi32> to vector<32x1xi32>
    %13 = vector.broadcast %12 : vector<32x1xi32> to vector<32x16xi32>
    %14 = vector.shape_cast %11 : vector<32x1xi32> to vector<32x1xi32>
    %15 = vector.broadcast %14 : vector<32x1xi32> to vector<32x16xi32>
    %16 = arith.select %9, %13, %15 : vector<32x16xi1>, vector<32x16xi32>
    %17 = arith.cmpi eq, %7, %16 : vector<32x16xi32>
    %18 = arith.extui %17 : vector<32x16xi1> to vector<32x16xi32>
    %19 = arith.sitofp %18 : vector<32x16xi32> to vector<32x16xf32>
    %20 = arith.truncf %19 : vector<32x16xf32> to vector<32x16xbf16>
    %c0_4 = arith.constant 0 : index
    %c0_5 = arith.constant 0 : index
    %21 = vector.load %arg16[%c0_4, %c0_5] : memref<16x32xbf16, #tpu.memory_space<vmem>>, vector<16x32xbf16>
    %cst = arith.constant dense<0.000000e+00> : vector<32x32xf32>
    %22 = tpu.matmul %20, %21, %cst {dimension_numbers = #tpu.dot_dimension_numbers<[1], [0], [0], [1], [0, 0, 1, 1], [], []>} : vector<32x16xbf16>, vector<16x32xbf16>, vector<32x32xf32> -> vector<32x32xf32>
    %c0_6 = arith.constant 0 : index
    %c0_7 = arith.constant 0 : index
    %c0_8 = arith.constant 0 : index
    %23 = vector.load %arg5[%c0_6, %c0_7, %c0_8] : memref<1x32x32xbf16, #tpu.memory_space<vmem>>, vector<1x32x32xbf16>
    %24 = vector.shape_cast %23 : vector<1x32x32xbf16> to vector<32x32xbf16>
    %25 = arith.extf %24 : vector<32x32xbf16> to vector<32x32xf32>
    %26 = arith.addf %22, %25 : vector<32x32xf32>
    %cst_9 = arith.constant 0.000000e+00 : f32
    %27 = vector.broadcast %cst_9 : f32 to vector<32x32xf32>
    %28 = arith.maximumf %26, %27 : vector<32x32xf32>
    %29 = arith.truncf %28 : vector<32x32xf32> to vector<32x32xbf16>
    %c0_10 = arith.constant 0 : index
    %c0_11 = arith.constant 0 : index
    %30 = vector.load %arg8[%c0_10, %c0_11] : memref<32x32xbf16, #tpu.memory_space<vmem>>, vector<32x32xbf16>
    %cst_12 = arith.constant dense<0.000000e+00> : vector<32x32xf32>
    %31 = tpu.matmul %29, %30, %cst_12 {dimension_numbers = #tpu.dot_dimension_numbers<[1], [0], [0], [1], [0, 0, 1, 1], [], []>} : vector<32x32xbf16>, vector<32x32xbf16>, vector<32x32xf32> -> vector<32x32xf32>
    %c0_13 = arith.constant 0 : index
    %c0_14 = arith.constant 0 : index
    %32 = vector.load %arg9[%c0_13, %c0_14] : memref<1x32xf32, #tpu.memory_space<vmem>>, vector<1x32xf32>
    %33 = vector.broadcast %32 : vector<1x32xf32> to vector<32x32xf32>
    %34 = arith.addf %31, %33 : vector<32x32xf32>
    %cst_15 = arith.constant 0.000000e+00 : f32
    %35 = vector.broadcast %cst_15 : f32 to vector<32x32xf32>
    %36 = arith.maximumf %34, %35 : vector<32x32xf32>
    %37 = arith.truncf %36 : vector<32x32xf32> to vector<32x32xbf16>
    %c0_16 = arith.constant 0 : index
    %c0_17 = arith.constant 0 : index
    %c0_18 = arith.constant 0 : index
    %38 = vector.load %arg15[%c0_16, %c0_17, %c0_18] : memref<1x32x32xbf16, #tpu.memory_space<vmem>>, vector<1x32x32xbf16>
    %39 = vector.shape_cast %38 : vector<1x32x32xbf16> to vector<32x32xbf16>
    %40 = vector.shape_cast %37 : vector<32x32xbf16> to vector<1x32x32xbf16>
    tpu.vector_store %arg15[%c0_16, %c0_17, %c0_18], %40 {strides = array<i32>} : memref<1x32x32xbf16, #tpu.memory_space<vmem>>, vector<1x32x32xbf16>,
    %c0_19 = arith.constant 0 : index
    %c0_20 = arith.constant 0 : index
    %c0_21 = arith.constant 0 : index
    %c0_22 = arith.constant 0 : index
    %41 = vector.load %arg4[%c0_19, %c0_20, %c0_21, %c0_22] : memref<1x1x1x32xi32, #tpu.memory_space<vmem>>, vector<1x1x1x32xi32>
    %42 = vector.shape_cast %41 : vector<1x1x1x32xi32> to vector<1x32xi32>
    %43 = tpu.iota {dimensions = array<i32: 0>} : vector<8x32xi32>
    %44 = vector.broadcast %42 : vector<1x32xi32> to vector<8x32xi32>
    %45 = arith.cmpi eq, %43, %44 : vector<8x32xi32>
    %46 = arith.extui %45 : vector<8x32xi1> to vector<8x32xi32>
    %47 = arith.sitofp %46 : vector<8x32xi32> to vector<8x32xf32>
    %48 = arith.truncf %47 : vector<8x32xf32> to vector<8x32xbf16>
    %c0_23 = arith.constant 0 : index
    %c0_24 = arith.constant 0 : index
    %49 = vector.load %arg17[%c0_23, %c0_24] : memref<8x32xf32, #tpu.memory_space<vmem>>, vector<8x32xf32>
    %cst_25 = arith.constant dense<0.000000e+00> : vector<8x32xf32>
    %50 = tpu.matmul %48, %37, %cst_25 {dimension_numbers = #tpu.dot_dimension_numbers<[1], [0], [0], [1], [0, 0, 1, 1], [], []>} : vector<8x32xbf16>, vector<32x32xbf16>, vector<8x32xf32> -> vector<8x32xf32>
    %51 = arith.addf %49, %50 : vector<8x32xf32>
    %c0_26 = arith.constant 0 : index
    %c0_27 = arith.constant 0 : index
    %52 = vector.load %arg17[%c0_26, %c0_27] : memref<8x32xf32, #tpu.memory_space<vmem>>, vector<8x32xf32>
    tpu.vector_store %arg17[%c0_26, %c0_27], %51 {strides = array<i32>} : memref<8x32xf32, #tpu.memory_space<vmem>>, vector<8x32xf32>,
    %c1_i32 = arith.constant 1 : i32
    %53 = arith.cmpi eq, %arg1, %c1_i32 : i32
    %54 = arith.extui %53 : i1 to i32
    %c0_i32_28 = arith.constant 0 : i32
    %55 = arith.cmpi ne, %54, %c0_i32_28 : i32
    scf.if %55 {
      %c0_29 = arith.constant 0 : index
      %c0_30 = arith.constant 0 : index
      %c0_31 = arith.constant 0 : index
      %56 = vector.load %arg2[%c0_29, %c0_30, %c0_31] : memref<1x8x32xf32, #tpu.memory_space<vmem>>, vector<1x8x32xf32>
      %57 = vector.shape_cast %56 : vector<1x8x32xf32> to vector<8x32xf32>
      %58 = arith.truncf %57 : vector<8x32xf32> to vector<8x32xbf16>
      %c0_32 = arith.constant 0 : index
      %c0_33 = arith.constant 0 : index
      %59 = vector.load %arg17[%c0_32, %c0_33] : memref<8x32xf32, #tpu.memory_space<vmem>>, vector<8x32xf32>
      %60 = arith.truncf %59 : vector<8x32xf32> to vector<8x32xbf16>
      %61 = tpu.concatenate %58, %60 in 1 : vector<8x32xbf16>, vector<8x32xbf16> -> vector<8x64xbf16>
      %c0_34 = arith.constant 0 : index
      %c0_35 = arith.constant 0 : index
      %62 = vector.load %arg10[%c0_34, %c0_35] : memref<64x32xbf16, #tpu.memory_space<vmem>>, vector<64x32xbf16>
      %cst_36 = arith.constant dense<0.000000e+00> : vector<8x32xf32>
      %63 = tpu.matmul %61, %62, %cst_36 {dimension_numbers = #tpu.dot_dimension_numbers<[1], [0], [0], [1], [0, 0, 1, 1], [], []>} : vector<8x64xbf16>, vector<64x32xbf16>, vector<8x32xf32> -> vector<8x32xf32>
      %c0_37 = arith.constant 0 : index
      %c0_38 = arith.constant 0 : index
      %64 = vector.load %arg11[%c0_37, %c0_38] : memref<1x32xf32, #tpu.memory_space<vmem>>, vector<1x32xf32>
      %65 = vector.broadcast %64 : vector<1x32xf32> to vector<8x32xf32>
      %66 = arith.addf %63, %65 : vector<8x32xf32>
      %cst_39 = arith.constant 0.000000e+00 : f32
      %67 = vector.broadcast %cst_39 : f32 to vector<8x32xf32>
      %68 = arith.maximumf %66, %67 : vector<8x32xf32>
      %69 = arith.truncf %68 : vector<8x32xf32> to vector<8x32xbf16>
      %c0_40 = arith.constant 0 : index
      %c0_41 = arith.constant 0 : index
      %70 = vector.load %arg12[%c0_40, %c0_41] : memref<32x32xbf16, #tpu.memory_space<vmem>>, vector<32x32xbf16>
      %cst_42 = arith.constant dense<0.000000e+00> : vector<8x32xf32>
      %71 = tpu.matmul %69, %70, %cst_42 {dimension_numbers = #tpu.dot_dimension_numbers<[1], [0], [0], [1], [0, 0, 1, 1], [], []>} : vector<8x32xbf16>, vector<32x32xbf16>, vector<8x32xf32> -> vector<8x32xf32>
      %c0_43 = arith.constant 0 : index
      %c0_44 = arith.constant 0 : index
      %72 = vector.load %arg13[%c0_43, %c0_44] : memref<1x32xf32, #tpu.memory_space<vmem>>, vector<1x32xf32>
      %73 = vector.broadcast %72 : vector<1x32xf32> to vector<8x32xf32>
      %74 = arith.addf %71, %73 : vector<8x32xf32>
      %75 = arith.addf %57, %74 : vector<8x32xf32>
      %c0_45 = arith.constant 0 : index
      %c0_46 = arith.constant 0 : index
      %c0_47 = arith.constant 0 : index
      %76 = vector.load %arg14[%c0_45, %c0_46, %c0_47] : memref<1x8x32xf32, #tpu.memory_space<vmem>>, vector<1x8x32xf32>
      %77 = vector.shape_cast %76 : vector<1x8x32xf32> to vector<8x32xf32>
      %78 = vector.shape_cast %75 : vector<8x32xf32> to vector<1x8x32xf32>
      tpu.vector_store %arg14[%c0_45, %c0_46, %c0_47], %78 {strides = array<i32>} : memref<1x8x32xf32, #tpu.memory_space<vmem>>, vector<1x8x32xf32>,
    } else {
    }
    return
  }
  func.func @transform_0(%arg0: i32, %arg1: i32) -> (i32, i32, i32) {
    %c0_i32 = arith.constant 0 : i32
    %c0_i32_0 = arith.constant 0 : i32
    %c0_i32_1 = arith.constant 0 : i32
    return %arg0, %c0_i32, %c0_i32_0 : i32, i32, i32
  }
  func.func @transform_1(%arg0: i32, %arg1: i32) -> (i32, i32, i32) {
    %c0_i32 = arith.constant 0 : i32
    %c0_i32_0 = arith.constant 0 : i32
    return %arg0, %arg1, %c0_i32 : i32, i32, i32
  }
  func.func @transform_2(%arg0: i32, %arg1: i32) -> (i32, i32, i32, i32) {
    %c0_i32 = arith.constant 0 : i32
    %c0_i32_0 = arith.constant 0 : i32
    %c0_i32_1 = arith.constant 0 : i32
    return %arg0, %arg1, %c0_i32, %c0_i32_0 : i32, i32, i32, i32
  }
  func.func @transform_3(%arg0: i32, %arg1: i32) -> (i32, i32, i32) {
    %c0_i32 = arith.constant 0 : i32
    %c0_i32_0 = arith.constant 0 : i32
    return %arg0, %arg1, %c0_i32 : i32, i32, i32
  }
  func.func @transform_4(%arg0: i32, %arg1: i32) -> (i32, i32) {
    %c0_i32 = arith.constant 0 : i32
    %c0_i32_0 = arith.constant 0 : i32
    %c0_i32_1 = arith.constant 0 : i32
    return %c0_i32, %c0_i32_0 : i32, i32
  }
  func.func @transform_5(%arg0: i32, %arg1: i32) -> (i32, i32) {
    %c0_i32 = arith.constant 0 : i32
    %c0_i32_0 = arith.constant 0 : i32
    %c0_i32_1 = arith.constant 0 : i32
    return %c0_i32, %c0_i32_0 : i32, i32
  }
  func.func @transform_6(%arg0: i32, %arg1: i32) -> (i32, i32) {
    %c0_i32 = arith.constant 0 : i32
    %c0_i32_0 = arith.constant 0 : i32
    %c0_i32_1 = arith.constant 0 : i32
    return %c0_i32, %c0_i32_0 : i32, i32
  }
  func.func @transform_7(%arg0: i32, %arg1: i32) -> (i32, i32) {
    %c0_i32 = arith.constant 0 : i32
    %c0_i32_0 = arith.constant 0 : i32
    %c0_i32_1 = arith.constant 0 : i32
    return %c0_i32, %c0_i32_0 : i32, i32
  }
  func.func @transform_8(%arg0: i32, %arg1: i32) -> (i32, i32) {
    %c0_i32 = arith.constant 0 : i32
    %c0_i32_0 = arith.constant 0 : i32
    %c0_i32_1 = arith.constant 0 : i32
    return %c0_i32, %c0_i32_0 : i32, i32
  }
  func.func @transform_9(%arg0: i32, %arg1: i32) -> (i32, i32) {
    %c0_i32 = arith.constant 0 : i32
    %c0_i32_0 = arith.constant 0 : i32
    %c0_i32_1 = arith.constant 0 : i32
    return %c0_i32, %c0_i32_0 : i32, i32
  }
  func.func @transform_10(%arg0: i32, %arg1: i32) -> (i32, i32) {
    %c0_i32 = arith.constant 0 : i32
    %c0_i32_0 = arith.constant 0 : i32
    %c0_i32_1 = arith.constant 0 : i32
    return %c0_i32, %c0_i32_0 : i32, i32
  }
  func.func @transform_11(%arg0: i32, %arg1: i32) -> (i32, i32) {
    %c0_i32 = arith.constant 0 : i32
    %c0_i32_0 = arith.constant 0 : i32
    %c0_i32_1 = arith.constant 0 : i32
    return %c0_i32, %c0_i32_0 : i32, i32
  }
  func.func @transform_12(%arg0: i32, %arg1: i32) -> (i32, i32, i32) {
    %c0_i32 = arith.constant 0 : i32
    %c0_i32_0 = arith.constant 0 : i32
    %c0_i32_1 = arith.constant 0 : i32
    return %arg0, %c0_i32, %c0_i32_0 : i32, i32, i32
  }
  func.func @transform_13(%arg0: i32, %arg1: i32) -> (i32, i32, i32) {
    %c0_i32 = arith.constant 0 : i32
    %c0_i32_0 = arith.constant 0 : i32
    return %arg0, %arg1, %c0_i32 : i32, i32, i32
  }
}

</mosaic_0001>

<llo_original>
// kernel: tpu_custom_call.1
$region0: #{tpu_custom_call.1}
  #allocation0 [shape = 'u32[]', space=smem, size = 0x4, offset = 0x4, fixed_abs, tag = 'smem constant byte address 0x4 - core index']
  #allocation1 [shape = 'u32[144,128]{1,0:T(1,128)}', space=vmem, size = 0x12000, scoped, tag = 'internal scratch']
  #allocation2 [shape = 'bf16[16,32]{1,0:T(16,128)(2,1)}', space=vmem, size = 0x1000, scoped, tag = 'scratch operand']
  #allocation3 [shape = 'f32[8,32]{1,0:T(8,128)}', space=vmem, size = 0x1000, scoped, tag = 'scratch operand']
  %s0 = inlined_call_operand.vmem [shape: f32[2,8,32], index: 0, kind: input, shape index: {}]
  %s1 = inlined_call_operand.vmem [shape: s32[2,64,2], index: 1, kind: input, shape index: {}]
  %s2 = inlined_call_operand.vmem [shape: s32[2,2,1,32], index: 2, kind: input, shape index: {}]
  %s3 = inlined_call_operand.vmem [shape: bf16[2,64,32], index: 3, kind: input, shape index: {}]
  %s4 = inlined_call_operand.vmem [shape: bf16[32,32], index: 4, kind: input, shape index: {}]
  %s5 = inlined_call_operand.vmem [shape: bf16[32,32], index: 5, kind: input, shape index: {}]
  %s6 = inlined_call_operand.vmem [shape: bf16[32,32], index: 6, kind: input, shape index: {}]
  %s7 = inlined_call_operand.vmem [shape: f32[1,32], index: 7, kind: input, shape index: {}]
  %s8 = inlined_call_operand.vmem [shape: bf16[64,32], index: 8, kind: input, shape index: {}]
  %s9 = inlined_call_operand.vmem [shape: f32[1,32], index: 9, kind: input, shape index: {}]
  %s10 = inlined_call_operand.vmem [shape: bf16[32,32], index: 10, kind: input, shape index: {}]
  %s11 = inlined_call_operand.vmem [shape: f32[1,32], index: 11, kind: input, shape index: {}]
  %s12 = inlined_call_operand.hbm [shape: f32[2,8,32], index: 12, kind: output, shape index: {0}]
  %s13 = inlined_call_operand.vmem [shape: bf16[2,64,32], index: 13, kind: output, shape index: {1}]
  %14 = xla_tuple %s12, %s13
  %s15 = sld [smem:[#allocation0]]
  $region97: #{tpu_custom_call.1} parent=0
    _
  %s17 = ssub.s32 1, %s15
  %s18 = scalar_select 0, %s17, %s15
  $region1: #{tpu_custom_call.1} parent=0
    #allocation4 [shape = 'u8[8192]{0}', space=vmem, size = 0x2000, scoped, tag = 'output window, operand 0']
    #allocation5 [shape = 's32[2]{0}', space=sflag, size = 0x8, scoped, tag = 'scoped memory for tpu_custom_call.1']
    %19 = vsyncpa [#allocation5], 0
    %s20 = scalar_lea.sflag [#allocation5], 1
    %21 = vsyncpa %s20, 0
    loop: start=0, step=1, limit=6
    $region2: #{tpu_custom_call.1} parent=1 // loop_pre_header
      _
    $region3: #{tpu_custom_call.1} parent=1 // loop_header
      %s23 = sphi 0, %s27
      %p24 = scmp.ge.s32.totalorder %s23, 6
      %s30 = sphi 0, %s42
      %s31 = sphi 0, %s38
      %s32 = sphi 0, %s30
      %s33 = sphi 0, %s31
      %s34 = sphi 0, %s32
      %s35 = sphi 0, %s33
      %s45 = sphi 0, %s47
      %s48 = sphi 0, %s45
      %s49 = sphi 0, %s48
      %s65 = sphi 0, %s49
      %s73 = sphi 0, %s75
      %s76 = sphi 0, %s73
      %s77 = sphi 0, %s76
      %s93 = sphi 0, %s77
      %s101 = sphi 0, %s103
      %s104 = sphi 0, %s101
      %s105 = sphi 0, %s104
      %s121 = sphi 0, %s105
      %s129 = sphi 0, %s131
      %s132 = sphi 0, %s129
      %s133 = sphi 0, %s132
      %s149 = sphi 0, %s133
      %s153 = sphi 0, %s153
      %s155 = sphi 0, %s153
      %s156 = sphi 0, %s155
      %s170 = sphi 0, %s156
      %s174 = sphi 0, %s174
      %s176 = sphi 0, %s174
      %s177 = sphi 0, %s176
      %s191 = sphi 0, %s177
      %s195 = sphi 0, %s195
      %s197 = sphi 0, %s195
      %s198 = sphi 0, %s197
      %s212 = sphi 0, %s198
      %s216 = sphi 0, %s216
      %s218 = sphi 0, %s216
      %s219 = sphi 0, %s218
      %s233 = sphi 0, %s219
      %s237 = sphi 0, %s237
      %s239 = sphi 0, %s237
      %s240 = sphi 0, %s239
      %s254 = sphi 0, %s240
      %s258 = sphi 0, %s258
      %s260 = sphi 0, %s258
      %s261 = sphi 0, %s260
      %s275 = sphi 0, %s261
      %s279 = sphi 0, %s279
      %s281 = sphi 0, %s279
      %s282 = sphi 0, %s281
      %s296 = sphi 0, %s282
      %s300 = sphi 0, %s300
      %s302 = sphi 0, %s300
      %s303 = sphi 0, %s302
      %s317 = sphi 0, %s303
      %s323 = sphi 0, %s325
      %s326 = sphi 0, %s323
      %s327 = sphi 0, %s326
      %s343 = sphi 0, %s327
      %s351 = sphi 0, %s353
      %s354 = sphi 0, %s351
      %s355 = sphi 0, %s354
      %s371 = sphi 0, %s355
    $region4: #{tpu_custom_call.1} parent=1 // loop_header_branch
      %26 = sbr.rel (%p24) target = $region8
    $region5: #{tpu_custom_call.1} parent=1 // loop_body
      %s28 = ssub.s32 %s23, 1
      %s29 = ssub.s32 %s23, 2
      %s36 = sadd.s32 1, %s31
      %p37 = scmp.ge.s32.totalorder %s36, 2
      %s38 = scalar_select %p37, 0, %s36
      %s39 = sadd.s32 1, %s30
      %s40 = scalar_select %p37, %s39, %s30
      %p41 = scmp.ge.s32.totalorder %s40, 2
      %s42 = scalar_select %p41, 0, %s40
      %s43 = ssub.s32 %s30, %s42
      %p44 = scmp.eq.s32.totalorder %s43, 0
      %s46 = sadd.s32 %s45, 1
      %s47 = scalar_select %p44, %s45, %s46
      %p50 = pneg %p44
      %p51 = scmp.eq.s32.totalorder %s23, 3
      %p52 = por %p50, %p51
      %p53 = scmp.ne.s32.totalorder %s45, %s48
      %p54 = scmp.eq.s32.totalorder %s23, 0
      %p55 = por %p53, %p54
      %p56 = scmp.ne.s32.totalorder %s45, %s48
      %p57 = scmp.eq.s32.totalorder %s28, 3
      %p58 = por %p56, %p57
      %p59 = scmp.ne.s32.totalorder %s48, %s49
      %p60 = scmp.eq.s32.totalorder %s28, 0
      %p61 = por %p59, %p60
      %p62 = scmp.ne.s32.totalorder %s48, %s49
      %p63 = scmp.eq.s32.totalorder %s29, 3
      %p64 = por %p62, %p63
      %p66 = scmp.ne.s32.totalorder %s49, %s65
      %p67 = scmp.eq.s32.totalorder %s29, 0
      %p68 = por %p66, %p67
      %s69 = ssub.s32 %s30, %s42
      %s70 = ssub.s32 %s31, %s38
      %s71 = sor.u32 %s69, %s70
      %p72 = scmp.eq.s32.totalorder %s71, 0
      %s74 = sadd.s32 %s73, 1
      %s75 = scalar_select %p72, %s73, %s74
      %p78 = pneg %p72
      %p79 = scmp.eq.s32.totalorder %s23, 3
      %p80 = por %p78, %p79
      %p81 = scmp.ne.s32.totalorder %s73, %s76
      %p82 = scmp.eq.s32.totalorder %s23, 0
      %p83 = por %p81, %p82
      %p84 = scmp.ne.s32.totalorder %s73, %s76
      %p85 = scmp.eq.s32.totalorder %s28, 3
      %p86 = por %p84, %p85
      %p87 = scmp.ne.s32.totalorder %s76, %s77
      %p88 = scmp.eq.s32.totalorder %s28, 0
      %p89 = por %p87, %p88
      %p90 = scmp.ne.s32.totalorder %s76, %s77
      %p91 = scmp.eq.s32.totalorder %s29, 3
      %p92 = por %p90, %p91
      %p94 = scmp.ne.s32.totalorder %s77, %s93
      %p95 = scmp.eq.s32.totalorder %s29, 0
      %p96 = por %p94, %p95
      %s97 = ssub.s32 %s30, %s42
      %s98 = ssub.s32 %s31, %s38
      %s99 = sor.u32 %s97, %s98
      %p100 = scmp.eq.s32.totalorder %s99, 0
      %s102 = sadd.s32 %s101, 1
      %s103 = scalar_select %p100, %s101, %s102
      %p106 = pneg %p100
      %p107 = scmp.eq.s32.totalorder %s23, 3
      %p108 = por %p106, %p107
      %p109 = scmp.ne.s32.totalorder %s101, %s104
      %p110 = scmp.eq.s32.totalorder %s23, 0
      %p111 = por %p109, %p110
      %p112 = scmp.ne.s32.totalorder %s101, %s104
      %p113 = scmp.eq.s32.totalorder %s28, 3
      %p114 = por %p112, %p113
      %p115 = scmp.ne.s32.totalorder %s104, %s105
      %p116 = scmp.eq.s32.totalorder %s28, 0
      %p117 = por %p115, %p116
      %p118 = scmp.ne.s32.totalorder %s104, %s105
      %p119 = scmp.eq.s32.totalorder %s29, 3
      %p120 = por %p118, %p119
      %p122 = scmp.ne.s32.totalorder %s105, %s121
      %p123 = scmp.eq.s32.totalorder %s29, 0
      %p124 = por %p122, %p123
      %s125 = ssub.s32 %s30, %s42
      %s126 = ssub.s32 %s31, %s38
      %s127 = sor.u32 %s125, %s126
      %p128 = scmp.eq.s32.totalorder %s127, 0
      %s130 = sadd.s32 %s129, 1
      %s131 = scalar_select %p128, %s129, %s130
      %p134 = pneg %p128
      %p135 = scmp.eq.s32.totalorder %s23, 3
      %p136 = por %p134, %p135
      %p137 = scmp.ne.s32.totalorder %s129, %s132
      %p138 = scmp.eq.s32.totalorder %s23, 0
      %p139 = por %p137, %p138
      %p140 = scmp.ne.s32.totalorder %s129, %s132
      %p141 = scmp.eq.s32.totalorder %s28, 3
      %p142 = por %p140, %p141
      %p143 = scmp.ne.s32.totalorder %s132, %s133
      %p144 = scmp.eq.s32.totalorder %s28, 0
      %p145 = por %p143, %p144
      %p146 = scmp.ne.s32.totalorder %s132, %s133
      %p147 = scmp.eq.s32.totalorder %s29, 3
      %p148 = por %p146, %p147
      %p150 = scmp.ne.s32.totalorder %s133, %s149
      %p151 = scmp.eq.s32.totalorder %s29, 0
      %p152 = por %p150, %p151
      %s154 = sadd.s32 %s153, 1
      %p157 = scmp.eq.s32.totalorder %s23, 3
      %p158 = scmp.ne.s32.totalorder %s153, %s155
      %p159 = scmp.eq.s32.totalorder %s23, 0
      %p160 = por %p158, %p159
      %p161 = scmp.ne.s32.totalorder %s153, %s155
      %p162 = scmp.eq.s32.totalorder %s28, 3
      %p163 = por %p161, %p162
      %p164 = scmp.ne.s32.totalorder %s155, %s156
      %p165 = scmp.eq.s32.totalorder %s28, 0
      %p166 = por %p164, %p165
      %p167 = scmp.ne.s32.totalorder %s155, %s156
      %p168 = scmp.eq.s32.totalorder %s29, 3
      %p169 = por %p167, %p168
      %p171 = scmp.ne.s32.totalorder %s156, %s170
      %p172 = scmp.eq.s32.totalorder %s29, 0
      %p173 = por %p171, %p172
      %s175 = sadd.s32 %s174, 1
      %p178 = scmp.eq.s32.totalorder %s23, 3
      %p179 = scmp.ne.s32.totalorder %s174, %s176
      %p180 = scmp.eq.s32.totalorder %s23, 0
      %p181 = por %p179, %p180
      %p182 = scmp.ne.s32.totalorder %s174, %s176
      %p183 = scmp.eq.s32.totalorder %s28, 3
      %p184 = por %p182, %p183
      %p185 = scmp.ne.s32.totalorder %s176, %s177
      %p186 = scmp.eq.s32.totalorder %s28, 0
      %p187 = por %p185, %p186
      %p188 = scmp.ne.s32.totalorder %s176, %s177
      %p189 = scmp.eq.s32.totalorder %s29, 3
      %p190 = por %p188, %p189
      %p192 = scmp.ne.s32.totalorder %s177, %s191
      %p193 = scmp.eq.s32.totalorder %s29, 0
      %p194 = por %p192, %p193
      %s196 = sadd.s32 %s195, 1
      %p199 = scmp.eq.s32.totalorder %s23, 3
      %p200 = scmp.ne.s32.totalorder %s195, %s197
      %p201 = scmp.eq.s32.totalorder %s23, 0
      %p202 = por %p200, %p201
      %p203 = scmp.ne.s32.totalorder %s195, %s197
      %p204 = scmp.eq.s32.totalorder %s28, 3
      %p205 = por %p203, %p204
      %p206 = scmp.ne.s32.totalorder %s197, %s198
      %p207 = scmp.eq.s32.totalorder %s28, 0
      %p208 = por %p206, %p207
      %p209 = scmp.ne.s32.totalorder %s197, %s198
      %p210 = scmp.eq.s32.totalorder %s29, 3
      %p211 = por %p209, %p210
      %p213 = scmp.ne.s32.totalorder %s198, %s212
      %p214 = scmp.eq.s32.totalorder %s29, 0
      %p215 = por %p213, %p214
      %s217 = sadd.s32 %s216, 1
      %p220 = scmp.eq.s32.totalorder %s23, 3
      %p221 = scmp.ne.s32.totalorder %s216, %s218
      %p222 = scmp.eq.s32.totalorder %s23, 0
      %p223 = por %p221, %p222
      %p224 = scmp.ne.s32.totalorder %s216, %s218
      %p225 = scmp.eq.s32.totalorder %s28, 3
      %p226 = por %p224, %p225
      %p227 = scmp.ne.s32.totalorder %s218, %s219
      %p228 = scmp.eq.s32.totalorder %s28, 0
      %p229 = por %p227, %p228
      %p230 = scmp.ne.s32.totalorder %s218, %s219
      %p231 = scmp.eq.s32.totalorder %s29, 3
      %p232 = por %p230, %p231
      %p234 = scmp.ne.s32.totalorder %s219, %s233
      %p235 = scmp.eq.s32.totalorder %s29, 0
      %p236 = por %p234, %p235
      %s238 = sadd.s32 %s237, 1
      %p241 = scmp.eq.s32.totalorder %s23, 3
      %p242 = scmp.ne.s32.totalorder %s237, %s239
      %p243 = scmp.eq.s32.totalorder %s23, 0
      %p244 = por %p242, %p243
      %p245 = scmp.ne.s32.totalorder %s237, %s239
      %p246 = scmp.eq.s32.totalorder %s28, 3
      %p247 = por %p245, %p246
      %p248 = scmp.ne.s32.totalorder %s239, %s240
      %p249 = scmp.eq.s32.totalorder %s28, 0
      %p250 = por %p248, %p249
      %p251 = scmp.ne.s32.totalorder %s239, %s240
      %p252 = scmp.eq.s32.totalorder %s29, 3
      %p253 = por %p251, %p252
      %p255 = scmp.ne.s32.totalorder %s240, %s254
      %p256 = scmp.eq.s32.totalorder %s29, 0
      %p257 = por %p255, %p256
      %s259 = sadd.s32 %s258, 1
      %p262 = scmp.eq.s32.totalorder %s23, 3
      %p263 = scmp.ne.s32.totalorder %s258, %s260
      %p264 = scmp.eq.s32.totalorder %s23, 0
      %p265 = por %p263, %p264
      %p266 = scmp.ne.s32.totalorder %s258, %s260
      %p267 = scmp.eq.s32.totalorder %s28, 3
      %p268 = por %p266, %p267
      %p269 = scmp.ne.s32.totalorder %s260, %s261
      %p270 = scmp.eq.s32.totalorder %s28, 0
      %p271 = por %p269, %p270
      %p272 = scmp.ne.s32.totalorder %s260, %s261
      %p273 = scmp.eq.s32.totalorder %s29, 3
      %p274 = por %p272, %p273
      %p276 = scmp.ne.s32.totalorder %s261, %s275
      %p277 = scmp.eq.s32.totalorder %s29, 0
      %p278 = por %p276, %p277
      %s280 = sadd.s32 %s279, 1
      %p283 = scmp.eq.s32.totalorder %s23, 3
      %p284 = scmp.ne.s32.totalorder %s279, %s281
      %p285 = scmp.eq.s32.totalorder %s23, 0
      %p286 = por %p284, %p285
      %p287 = scmp.ne.s32.totalorder %s279, %s281
      %p288 = scmp.eq.s32.totalorder %s28, 3
      %p289 = por %p287, %p288
      %p290 = scmp.ne.s32.totalorder %s281, %s282
      %p291 = scmp.eq.s32.totalorder %s28, 0
      %p292 = por %p290, %p291
      %p293 = scmp.ne.s32.totalorder %s281, %s282
      %p294 = scmp.eq.s32.totalorder %s29, 3
      %p295 = por %p293, %p294
      %p297 = scmp.ne.s32.totalorder %s282, %s296
      %p298 = scmp.eq.s32.totalorder %s29, 0
      %p299 = por %p297, %p298
      %s301 = sadd.s32 %s300, 1
      %p304 = scmp.eq.s32.totalorder %s23, 3
      %p305 = scmp.ne.s32.totalorder %s300, %s302
      %p306 = scmp.eq.s32.totalorder %s23, 0
      %p307 = por %p305, %p306
      %p308 = scmp.ne.s32.totalorder %s300, %s302
      %p309 = scmp.eq.s32.totalorder %s28, 3
      %p310 = por %p308, %p309
      %p311 = scmp.ne.s32.totalorder %s302, %s303
      %p312 = scmp.eq.s32.totalorder %s28, 0
      %p313 = por %p311, %p312
      %p314 = scmp.ne.s32.totalorder %s302, %s303
      %p315 = scmp.eq.s32.totalorder %s29, 3
      %p316 = por %p314, %p315
      %p318 = scmp.ne.s32.totalorder %s303, %s317
      %p319 = scmp.eq.s32.totalorder %s29, 0
      %p320 = por %p318, %p319
      %s321 = ssub.s32 %s30, %s42
      %p322 = scmp.eq.s32.totalorder %s321, 0
      %s324 = sadd.s32 %s323, 1
      %s325 = scalar_select %p322, %s323, %s324
      %p328 = pneg %p322
      %p329 = scmp.eq.s32.totalorder %s23, 3
      %p330 = por %p328, %p329
      %p331 = scmp.ne.s32.totalorder %s323, %s326
      %p332 = scmp.eq.s32.totalorder %s23, 0
      %p333 = por %p331, %p332
      %p334 = scmp.ne.s32.totalorder %s323, %s326
      %p335 = scmp.eq.s32.totalorder %s28, 3
      %p336 = por %p334, %p335
      %p337 = scmp.ne.s32.totalorder %s326, %s327
      %p338 = scmp.eq.s32.totalorder %s28, 0
      %p339 = por %p337, %p338
      %p340 = scmp.ne.s32.totalorder %s326, %s327
      %p341 = scmp.eq.s32.totalorder %s29, 3
      %p342 = por %p340, %p341
      %p344 = scmp.ne.s32.totalorder %s327, %s343
      %p345 = scmp.eq.s32.totalorder %s29, 0
      %p346 = por %p344, %p345
      %s347 = ssub.s32 %s30, %s42
      %s348 = ssub.s32 %s31, %s38
      %s349 = sor.u32 %s347, %s348
      %p350 = scmp.eq.s32.totalorder %s349, 0
      %s352 = sadd.s32 %s351, 1
      %s353 = scalar_select %p350, %s351, %s352
      %p356 = pneg %p350
      %p357 = scmp.eq.s32.totalorder %s23, 3
      %p358 = por %p356, %p357
      %p359 = scmp.ne.s32.totalorder %s351, %s354
      %p360 = scmp.eq.s32.totalorder %s23, 0
      %p361 = por %p359, %p360
      %p362 = scmp.ne.s32.totalorder %s351, %s354
      %p363 = scmp.eq.s32.totalorder %s28, 3
      %p364 = por %p362, %p363
      %p365 = scmp.ne.s32.totalorder %s354, %s355
      %p366 = scmp.eq.s32.totalorder %s28, 0
      %p367 = por %p365, %p366
      %p368 = scmp.ne.s32.totalorder %s354, %s355
      %p369 = scmp.eq.s32.totalorder %s29, 3
      %p370 = por %p368, %p369
      %p372 = scmp.ne.s32.totalorder %s355, %s371
      %p373 = scmp.eq.s32.totalorder %s29, 0
      %p374 = por %p372, %p373
      %p375 = scmp.le.s32.totalorder 1, %s23
      %p376 = scmp.lt.s32.totalorder %s23, 5
      %p377 = pnand %p375, %p376
      %p378 = pneg %p377
      // Predicated region
      $region9: #{tpu_custom_call.1} parent=5 // pred_check
        _
      $region10: #{tpu_custom_call.1} parent=5 // pred_check_branch
        %380 = sbr.rel (%p377) target = $region12
      $region11: #{tpu_custom_call.1} parent=5 // pred_region
        %s381 = ssub.s32 %s23, 1
        // Predicated region
        $region13: #{tpu_custom_call.1} parent=11 // pred_check
          %p382 = pneg %p166
        $region14: #{tpu_custom_call.1} parent=11 // pred_check_branch
          %384 = sbr.rel (%p382) target = $region16
        $region15: #{tpu_custom_call.1} parent=11 // pred_region
          _
        $region16: #{tpu_custom_call.1} parent=11 // pred_fallthru
          _
        // Predicated region
        $region17: #{tpu_custom_call.1} parent=11 // pred_check
          %p385 = pneg %p187
        $region18: #{tpu_custom_call.1} parent=11 // pred_check_branch
          %387 = sbr.rel (%p385) target = $region20
        $region19: #{tpu_custom_call.1} parent=11 // pred_region
          _
        $region20: #{tpu_custom_call.1} parent=11 // pred_fallthru
          _
        // Predicated region
        $region21: #{tpu_custom_call.1} parent=11 // pred_check
          %p388 = pneg %p208
        $region22: #{tpu_custom_call.1} parent=11 // pred_check_branch
          %390 = sbr.rel (%p388) target = $region24
        $region23: #{tpu_custom_call.1} parent=11 // pred_region
          _
        $region24: #{tpu_custom_call.1} parent=11 // pred_fallthru
          _
        // Predicated region
        $region25: #{tpu_custom_call.1} parent=11 // pred_check
          %p391 = pneg %p229
        $region26: #{tpu_custom_call.1} parent=11 // pred_check_branch
          %393 = sbr.rel (%p391) target = $region28
        $region27: #{tpu_custom_call.1} parent=11 // pred_region
          _
        $region28: #{tpu_custom_call.1} parent=11 // pred_fallthru
          _
        // Predicated region
        $region29: #{tpu_custom_call.1} parent=11 // pred_check
          %p394 = pneg %p250
        $region30: #{tpu_custom_call.1} parent=11 // pred_check_branch
          %396 = sbr.rel (%p394) target = $region32
        $region31: #{tpu_custom_call.1} parent=11 // pred_region
          _
        $region32: #{tpu_custom_call.1} parent=11 // pred_fallthru
          _
        // Predicated region
        $region33: #{tpu_custom_call.1} parent=11 // pred_check
          %p397 = pneg %p271
        $region34: #{tpu_custom_call.1} parent=11 // pred_check_branch
          %399 = sbr.rel (%p397) target = $region36
        $region35: #{tpu_custom_call.1} parent=11 // pred_region
          _
        $region36: #{tpu_custom_call.1} parent=11 // pred_fallthru
          _
        // Predicated region
        $region37: #{tpu_custom_call.1} parent=11 // pred_check
          %p400 = pneg %p292
        $region38: #{tpu_custom_call.1} parent=11 // pred_check_branch
          %402 = sbr.rel (%p400) target = $region40
        $region39: #{tpu_custom_call.1} parent=11 // pred_region
          _
        $region40: #{tpu_custom_call.1} parent=11 // pred_fallthru
          _
        // Predicated region
        $region41: #{tpu_custom_call.1} parent=11 // pred_check
          %p403 = pneg %p313
        $region42: #{tpu_custom_call.1} parent=11 // pred_check_branch
          %405 = sbr.rel (%p403) target = $region44
        $region43: #{tpu_custom_call.1} parent=11 // pred_region
          _
        $region44: #{tpu_custom_call.1} parent=11 // pred_fallthru
          _
      $region12: #{tpu_custom_call.1} parent=5 // pred_fallthru
        _
      %p406 = scmp.lt.s32.totalorder %s23, 4
      // Predicated region
      $region45: #{tpu_custom_call.1} parent=5 // pred_check
        %p407 = pneg %p406
      $region46: #{tpu_custom_call.1} parent=5 // pred_check_branch
        %409 = sbr.rel (%p407) target = $region48
      $region47: #{tpu_custom_call.1} parent=5 // pred_region
        // Predicated region
        $region49: #{tpu_custom_call.1} parent=47 // pred_check
          %p410 = pneg %p55
        $region50: #{tpu_custom_call.1} parent=47 // pred_check_branch
          %412 = sbr.rel (%p410) target = $region52
        $region51: #{tpu_custom_call.1} parent=47 // pred_region
          %p413 = scmp.lt.s32.totalorder %s30, 1
          %s414 = scalar_select %p413, %s30, 1
          %s415 = smul.addr %s414, 8
          %s416 = scalar_lea.vmem %s0, %s415
        $region52: #{tpu_custom_call.1} parent=47 // pred_fallthru
          _
        // Predicated region
        $region53: #{tpu_custom_call.1} parent=47 // pred_check
          %p417 = pneg %p83
        $region54: #{tpu_custom_call.1} parent=47 // pred_check_branch
          %419 = sbr.rel (%p417) target = $region56
        $region55: #{tpu_custom_call.1} parent=47 // pred_region
          %s420 = smul.u32 4, %s31
          %p421 = scmp.lt.s32.totalorder %s30, 1
          %s422 = scalar_select %p421, %s30, 1
          %p423 = scmp.lt.s32.totalorder %s420, 7
          %s424 = scalar_select %p423, %s420, 7
          %s425 = smul.addr %s422, 8
          %s426 = sadd.s32 %s424, %s425
          %s427 = smul.addr %s426, 8
          %s428 = scalar_lea.vmem %s1, %s427
          %s429 = smul.u32 4, %s31
        $region56: #{tpu_custom_call.1} parent=47 // pred_fallthru
          _
        // Predicated region
        $region57: #{tpu_custom_call.1} parent=47 // pred_check
          %p430 = pneg %p111
        $region58: #{tpu_custom_call.1} parent=47 // pred_check_branch
          %432 = sbr.rel (%p430) target = $region60
        $region59: #{tpu_custom_call.1} parent=47 // pred_region
          %p433 = scmp.lt.s32.totalorder %s30, 1
          %s434 = scalar_select %p433, %s30, 1
          %p435 = scmp.lt.s32.totalorder %s31, 1
          %s436 = scalar_select %p435, %s31, 1
          %s437 = smul.addr %s434, 2
          %s438 = sadd.s32 %s436, %s437
          %s439 = scalar_lea.vmem %s2, %s438
        $region60: #{tpu_custom_call.1} parent=47 // pred_fallthru
          _
        // Predicated region
        $region61: #{tpu_custom_call.1} parent=47 // pred_check
          %p440 = pneg %p139
        $region62: #{tpu_custom_call.1} parent=47 // pred_check_branch
          %442 = sbr.rel (%p440) target = $region64
        $region63: #{tpu_custom_call.1} parent=47 // pred_region
          %s443 = smul.u32 4, %s31
          %p444 = scmp.lt.s32.totalorder %s30, 1
          %s445 = scalar_select %p444, %s30, 1
          %p446 = scmp.lt.s32.totalorder %s443, 7
          %s447 = scalar_select %p446, %s443, 7
          %s448 = smul.addr %s445, 8
          %s449 = sadd.s32 %s447, %s448
          %s450 = smul.addr %s449, 4
          %s451 = scalar_lea.vmem %s3, %s450
          %s452 = smul.u32 4, %s31
        $region64: #{tpu_custom_call.1} parent=47 // pred_fallthru
          _
      $region48: #{tpu_custom_call.1} parent=5 // pred_fallthru
        _
      %p453 = scmp.le.s32.totalorder 1, %s23
      %p454 = scmp.lt.s32.totalorder %s23, 5
      %p455 = pnand %p453, %p454
      %p456 = pneg %p455
      // Predicated region
      $region65: #{tpu_custom_call.1} parent=5 // pred_check
        _
      $region66: #{tpu_custom_call.1} parent=5 // pred_check_branch
        %458 = sbr.rel (%p455) target = $region68
      $region67: #{tpu_custom_call.1} parent=5 // pred_region
        %s459 = ssub.s32 %s23, 1
        %p460 = scmp.lt.s32.totalorder %s32, 1
        %s461 = scalar_select %p460, %s32, 1
        %s462 = smul.addr %s461, 8
        %s463 = scalar_lea.vmem %s0, %s462
        %p464 = pneg %p61
        %p465 = pneg %p58
        %s466 = smul.u32 4, %s33
        %p467 = scmp.lt.s32.totalorder %s32, 1
        %s468 = scalar_select %p467, %s32, 1
        %p469 = scmp.lt.s32.totalorder %s466, 7
        %s470 = scalar_select %p469, %s466, 7
        %s471 = smul.addr %s468, 8
        %s472 = sadd.s32 %s470, %s471
        %s473 = smul.addr %s472, 8
        %s474 = scalar_lea.vmem %s1, %s473
        %p475 = pneg %p89
        %p476 = pneg %p86
        %p477 = scmp.lt.s32.totalorder %s32, 1
        %s478 = scalar_select %p477, %s32, 1
        %p479 = scmp.lt.s32.totalorder %s33, 1
        %s480 = scalar_select %p479, %s33, 1
        %s481 = smul.addr %s478, 2
        %s482 = sadd.s32 %s480, %s481
        %s483 = scalar_lea.vmem %s2, %s482
        %p484 = pneg %p117
        %p485 = pneg %p114
        %s486 = smul.u32 4, %s33
        %p487 = scmp.lt.s32.totalorder %s32, 1
        %s488 = scalar_select %p487, %s32, 1
        %p489 = scmp.lt.s32.totalorder %s486, 7
        %s490 = scalar_select %p489, %s486, 7
        %s491 = smul.addr %s488, 8
        %s492 = sadd.s32 %s490, %s491
        %s493 = smul.addr %s492, 4
        %s494 = scalar_lea.vmem %s3, %s493
        %p495 = pneg %p145
        %p496 = pneg %p142
        %p497 = pneg %p166
        %p498 = pneg %p163
        %p499 = pneg %p187
        %p500 = pneg %p184
        %p501 = pneg %p208
        %p502 = pneg %p205
        %p503 = pneg %p229
        %p504 = pneg %p226
        %p505 = pneg %p250
        %p506 = pneg %p247
        %p507 = pneg %p271
        %p508 = pneg %p268
        %p509 = pneg %p292
        %p510 = pneg %p289
        %p511 = pneg %p313
        %p512 = pneg %p310
        %p513 = pneg %p339
        %p514 = pneg %p336
        %s515 = sand.u32 %s326, 1
        %s516 = scalar_lea.sflag [#allocation5], %s515
        %s517 = sand.u32 %s326, 1
        %s518 = smul.addr %s517, 8
        %s519 = scalar_lea.vmem [#allocation4], %s518
        %p520 = pneg %p367
        %p521 = pneg %p364
        %s522 = smul.u32 4, %s33
        %p523 = scmp.lt.s32.totalorder %s32, 1
        %s524 = scalar_select %p523, %s32, 1
        %p525 = scmp.lt.s32.totalorder %s522, 7
        %s526 = scalar_select %p525, %s522, 7
        %s527 = smul.addr %s524, 8
        %s528 = sadd.s32 %s526, %s527
        %s529 = smul.addr %s528, 4
        %s530 = scalar_lea.vmem %s13, %s529
        %p531 = scmp.lt.s32.totalorder %s32, 1
        %s532 = scalar_select %p531, %s32, 1
        %s533 = smul.addr %s532, 8
        %s534 = scalar_lea.vmem %s0, %s533
        %s535 = smul.u32 4, %s33
        %p536 = scmp.lt.s32.totalorder %s32, 1
        %s537 = scalar_select %p536, %s32, 1
        %p538 = scmp.lt.s32.totalorder %s535, 7
        %s539 = scalar_select %p538, %s535, 7
        %s540 = smul.addr %s537, 8
        %s541 = sadd.s32 %s539, %s540
        %s542 = smul.addr %s541, 8
        %s543 = scalar_lea.vmem %s1, %s542
        %s544 = smul.u32 4, %s33
        %p545 = scmp.lt.s32.totalorder %s32, 1
        %s546 = scalar_select %p545, %s32, 1
        %p547 = scmp.lt.s32.totalorder %s33, 1
        %s548 = scalar_select %p547, %s33, 1
        %s549 = smul.addr %s546, 2
        %s550 = sadd.s32 %s548, %s549
        %s551 = scalar_lea.vmem %s2, %s550
        %s552 = smul.u32 4, %s33
        %p553 = scmp.lt.s32.totalorder %s32, 1
        %s554 = scalar_select %p553, %s32, 1
        %p555 = scmp.lt.s32.totalorder %s552, 7
        %s556 = scalar_select %p555, %s552, 7
        %s557 = smul.addr %s554, 8
        %s558 = sadd.s32 %s556, %s557
        %s559 = smul.addr %s558, 4
        %s560 = scalar_lea.vmem %s3, %s559
        %s561 = smul.u32 4, %s33
        %s562 = smul.u32 4, %s33
        %p563 = scmp.lt.s32.totalorder %s32, 1
        %s564 = scalar_select %p563, %s32, 1
        %p565 = scmp.lt.s32.totalorder %s562, 7
        %s566 = scalar_select %p565, %s562, 7
        %s567 = smul.addr %s564, 8
        %s568 = sadd.s32 %s566, %s567
        %s569 = smul.addr %s568, 4
        %s570 = scalar_lea.vmem %s13, %s569
        %s571 = smul.u32 4, %s33
        %p573 = scmp.eq.s32.totalorder %s33, 0
        // Predicated region
        $region69: #{tpu_custom_call.1} parent=67 // pred_check
          %p574 = pneg %p573
        $region70: #{tpu_custom_call.1} parent=67 // pred_check_branch
          %576 = sbr.rel (%p574) target = $region72
        $region71: #{tpu_custom_call.1} parent=67 // pred_region
          %vm577 = vcmask 261120
          %578 = vst.msk [vmem:[#allocation3] sm:$0xff] %vm577, 0.0
          %v579 = vld [vmem:[%s534] sm:$0xff]
          %v580 = vpack.c.bf16 %v579, %v579
          %v581 = vld [vmem:[%s4] sm:$0xf]
          %v582 = vld [vmem:[%s4 + $0x4] sm:$0xf]
          %v583 = vld [vmem:[%s4 + $0x8] sm:$0xf]
          %v584 = vld [vmem:[%s4 + $0xc] sm:$0xf]
          %v589 = vunpack.c.l.b16 %v581
          %v590 = vunpack.c.l.b16 %v582
          %v591 = vunpack.c.l.b16 %v583
          %v592 = vunpack.c.l.b16 %v584
          %v593 = vpack.c.b16 %v590, %v589
          %v594 = vpack.c.b16 %v592, %v591
          %v598 = vsel %vm577, %v580, 0
          %600 = vmatprep.subr.bf16.mxu0 0
          %601 = vmatpush1.bf16.msra.mxu0 %v593
          %602 = vmatprep.subr.bf16.mxu0 0
          %603 = vmatpush1.bf16.msra.mxu0 %v594
          %604 = vmatprep.subr.bf16.mxu0 0
          %605 = vmatpush1.bf16.msra.mxu0 0
          %606 = vmatprep.subr.bf16.mxu0 0
          %607 = vmatpush1.bf16.msra.mxu0 0
          %608 = vmatprep.subr.bf16.mxu0 0
          %609 = vmatpush1.bf16.msra.mxu0 0
          %610 = vmatprep.subr.bf16.mxu0 0
          %611 = vmatpush1.bf16.msra.mxu0 0
          %612 = vmatprep.subr.bf16.mxu0 0
          %613 = vmatpush1.bf16.msra.mxu0 0
          %614 = vmatprep.subr.bf16.mxu0 0
          %615 = vmatpush1.bf16.msra.mxu0 0
          %616 = vmatprep.subr.bf16.mxu0 0
          %617 = vmatpush1.bf16.msra.mxu0 0
          %618 = vmatprep.subr.bf16.mxu0 0
          %619 = vmatpush1.bf16.msra.mxu0 0
          %620 = vmatprep.subr.bf16.mxu0 0
          %621 = vmatpush1.bf16.msra.mxu0 0
          %622 = vmatprep.subr.bf16.mxu0 0
          %623 = vmatpush1.bf16.msra.mxu0 0
          %624 = vmatprep.subr.bf16.mxu0 0
          %625 = vmatpush1.bf16.msra.mxu0 0
          %626 = vmatprep.subr.bf16.mxu0 0
          %627 = vmatpush1.bf16.msra.mxu0 0
          %628 = vmatprep.subr.bf16.mxu0 0
          %629 = vmatpush1.bf16.msra.mxu0 0
          %630 = vmatprep.subr.bf16.mxu0 0
          %631 = vmatpush1.bf16.msra.mxu0 0
          %632 = vmatprep.mubr.bf16.mxu0 0
          %633 = vmatmul.mubr.bf16.gmra.mrb[0].mxu0 %v598
          %v634 = vpop.f32.mrb[0].mxu0
          %v635 = vadd.f32 0.0, %v634
          %v636 = vpop.f32.mrb[0].mxu0
          %v637 = vpop.f32.mrb[0].mxu0
          %v638 = vpop.f32.mrb[0].mxu0
          %639 = vdwg.mxu0
          %v640 = vld [vmem:[%s5] sm:$0xf]
          %v641 = vld [vmem:[%s5 + $0x4] sm:$0xf]
          %v642 = vld [vmem:[%s5 + $0x8] sm:$0xf]
          %v643 = vld [vmem:[%s5 + $0xc] sm:$0xf]
          %v648 = vunpack.c.l.b16 %v640
          %v649 = vunpack.c.l.b16 %v641
          %v650 = vunpack.c.l.b16 %v642
          %v651 = vunpack.c.l.b16 %v643
          %v652 = vpack.c.b16 %v649, %v648
          %v653 = vpack.c.b16 %v651, %v650
          %656 = vmatprep.subr.bf16.mxu0 0
          %657 = vmatpush1.bf16.msra.mxu0 %v652
          %658 = vmatprep.subr.bf16.mxu0 0
          %659 = vmatpush1.bf16.msra.mxu0 %v653
          %660 = vmatprep.subr.bf16.mxu0 0
          %661 = vmatpush1.bf16.msra.mxu0 0
          %662 = vmatprep.subr.bf16.mxu0 0
          %663 = vmatpush1.bf16.msra.mxu0 0
          %664 = vmatprep.subr.bf16.mxu0 0
          %665 = vmatpush1.bf16.msra.mxu0 0
          %666 = vmatprep.subr.bf16.mxu0 0
          %667 = vmatpush1.bf16.msra.mxu0 0
          %668 = vmatprep.subr.bf16.mxu0 0
          %669 = vmatpush1.bf16.msra.mxu0 0
          %670 = vmatprep.subr.bf16.mxu0 0
          %671 = vmatpush1.bf16.msra.mxu0 0
          %672 = vmatprep.subr.bf16.mxu0 0
          %673 = vmatpush1.bf16.msra.mxu0 0
          %674 = vmatprep.subr.bf16.mxu0 0
          %675 = vmatpush1.bf16.msra.mxu0 0
          %676 = vmatprep.subr.bf16.mxu0 0
          %677 = vmatpush1.bf16.msra.mxu0 0
          %678 = vmatprep.subr.bf16.mxu0 0
          %679 = vmatpush1.bf16.msra.mxu0 0
          %680 = vmatprep.subr.bf16.mxu0 0
          %681 = vmatpush1.bf16.msra.mxu0 0
          %682 = vmatprep.subr.bf16.mxu0 0
          %683 = vmatpush1.bf16.msra.mxu0 0
          %684 = vmatprep.subr.bf16.mxu0 0
          %685 = vmatpush1.bf16.msra.mxu0 0
          %686 = vmatprep.subr.bf16.mxu0 0
          %687 = vmatpush1.bf16.msra.mxu0 0
          %688 = vmatprep.mubr.bf16.mxu0 0
          %689 = vmatmul.mubr.bf16.gmra.mrb[0].mxu0 %v598
          %v690 = vpop.f32.mrb[0].mxu0
          %v691 = vadd.f32 0.0, %v690
          %v692 = vpop.f32.mrb[0].mxu0
          %v693 = vpop.f32.mrb[0].mxu0
          %v694 = vpop.f32.mrb[0].mxu0
          %695 = vdwg.mxu0
          %v696 = vpack.c.bf16 %v691, %v635
          %697 = vst.msk [vmem:[#allocation2] sm:$0xff] %vm577, %v696
        $region72: #{tpu_custom_call.1} parent=67 // pred_fallthru
          _
        %v698 = vld [vmem:[%s543] sm:$0xff]
        %v699 = vld [vmem:[%s543 + $0x8] sm:$0xff]
        %v700 = vld [vmem:[%s543 + $0x10] sm:$0xff]
        %v701 = vld [vmem:[%s543 + $0x18] sm:$0xff]
        %v702 = vlaneseq
        %v703 = vand.u32 %v702, 127
        %vm704 = vcmp.lt.s32.totalorder %v703, 8
        %v705 = vadd.s32 %v698, 8
        %v706 = vadd.s32 %v699, 8
        %v707 = vadd.s32 %v700, 8
        %v708 = vadd.s32 %v701, 8
        %709 = vset.pattern.permute.xlu0 0
        %710 = vperm.xlu0 %709, %v698
        %v711 = vpop.permute.xlu0 %710
        %712 = vset.pattern.permute.xlu0 0
        %713 = vperm.xlu0 %712, %v699
        %v714 = vpop.permute.xlu0 %713
        %715 = vset.pattern.permute.xlu0 0
        %716 = vperm.xlu0 %715, %v700
        %v717 = vpop.permute.xlu0 %716
        %718 = vset.pattern.permute.xlu0 0
        %719 = vperm.xlu0 %718, %v701
        %v720 = vpop.permute.xlu0 %719
        %721 = vset.pattern.permute.xlu0 1
        %722 = vperm.xlu0 %721, %v705
        %v723 = vpop.permute.xlu0 %722
        %724 = vset.pattern.permute.xlu0 1
        %725 = vperm.xlu0 %724, %v706
        %v726 = vpop.permute.xlu0 %725
        %727 = vset.pattern.permute.xlu0 1
        %728 = vperm.xlu0 %727, %v707
        %v729 = vpop.permute.xlu0 %728
        %730 = vset.pattern.permute.xlu0 1
        %731 = vperm.xlu0 %730, %v708
        %v732 = vpop.permute.xlu0 %731
        %v733 = vsel %vm704, %v711, %v723
        %v734 = vsel %vm704, %v714, %v726
        %v735 = vsel %vm704, %v717, %v729
        %v736 = vsel %vm704, %v720, %v732
        %vm737 = vcmp.eq.s32.totalorder %v703, %v733
        %vm738 = vcmp.eq.s32.totalorder %v703, %v734
        %vm739 = vcmp.eq.s32.totalorder %v703, %v735
        %vm740 = vcmp.eq.s32.totalorder %v703, %v736
        %v741 = vsel %vm737, 1, 0
        %v742 = vsel %vm738, 1, 0
        %v743 = vsel %vm739, 1, 0
        %v744 = vsel %vm740, 1, 0
        %v745 = vcvt.s32.f32 %v741
        %v746 = vcvt.s32.f32 %v742
        %v747 = vcvt.s32.f32 %v743
        %v748 = vcvt.s32.f32 %v744
        %v749 = vpack.c.bf16 %v746, %v745
        %v750 = vpack.c.bf16 %v748, %v747
        %v751 = vld [vmem:[#allocation2] sm:$0xff]
        %v752 = vld [vmem:[%s560] sm:$0xf]
        %v753 = vld [vmem:[%s560 + $0x4] sm:$0xf]
        %v754 = vld [vmem:[%s560 + $0x8] sm:$0xf]
        %v755 = vld [vmem:[%s560 + $0xc] sm:$0xf]
        %v756 = vunpack.c.l.bf16 %v752
        %v757 = vunpack.c.l.bf16 %v753
        %v758 = vunpack.c.l.bf16 %v754
        %v759 = vunpack.c.l.bf16 %v755
        %vm760 = vcmask 130048
        %v762 = vsel %vm760, %v749, 0
        %v765 = vsel %vm760, %v750, 0
        %767 = vmatprep.subr.bf16.mxu0 0
        %768 = vmatpush1.bf16.msra.mxu0 %v751
        %769 = vmatprep.subr.bf16.mxu0 0
        %770 = vmatpush1.bf16.msra.mxu0 0
        %771 = vmatprep.subr.bf16.mxu0 0
        %772 = vmatpush1.bf16.msra.mxu0 0
        %773 = vmatprep.subr.bf16.mxu0 0
        %774 = vmatpush1.bf16.msra.mxu0 0
        %775 = vmatprep.subr.bf16.mxu0 0
        %776 = vmatpush1.bf16.msra.mxu0 0
        %777 = vmatprep.subr.bf16.mxu0 0
        %778 = vmatpush1.bf16.msra.mxu0 0
        %779 = vmatprep.subr.bf16.mxu0 0
        %780 = vmatpush1.bf16.msra.mxu0 0
        %781 = vmatprep.subr.bf16.mxu0 0
        %782 = vmatpush1.bf16.msra.mxu0 0
        %783 = vmatprep.subr.bf16.mxu0 0
        %784 = vmatpush1.bf16.msra.mxu0 0
        %785 = vmatprep.subr.bf16.mxu0 0
        %786 = vmatpush1.bf16.msra.mxu0 0
        %787 = vmatprep.subr.bf16.mxu0 0
        %788 = vmatpush1.bf16.msra.mxu0 0
        %789 = vmatprep.subr.bf16.mxu0 0
        %790 = vmatpush1.bf16.msra.mxu0 0
        %791 = vmatprep.subr.bf16.mxu0 0
        %792 = vmatpush1.bf16.msra.mxu0 0
        %793 = vmatprep.subr.bf16.mxu0 0
        %794 = vmatpush1.bf16.msra.mxu0 0
        %795 = vmatprep.subr.bf16.mxu0 0
        %796 = vmatpush1.bf16.msra.mxu0 0
        %797 = vmatprep.subr.bf16.mxu0 0
        %798 = vmatpush1.bf16.msra.mxu0 0
        %799 = vmatprep.mubr.bf16.mxu0 0
        %800 = vmatmul.mubr.bf16.gmra.mrb[0].mxu0 %v762
        %v801 = vpop.f32.mrb[0].mxu0
        %v802 = vadd.f32 %v756, %v801
        %v803 = vpop.f32.mrb[0].mxu0
        %v804 = vpop.f32.mrb[0].mxu0
        %v805 = vadd.f32 %v757, %v804
        %v806 = vpop.f32.mrb[0].mxu0
        %807 = vmatprep.mubr.bf16.mxu0 0
        %808 = vmatmul.mubr.bf16.gmra.mrb[0].mxu0 %v765
        %v809 = vpop.f32.mrb[0].mxu0
        %v810 = vadd.f32 %v758, %v809
        %v811 = vpop.f32.mrb[0].mxu0
        %v812 = vpop.f32.mrb[0].mxu0
        %v813 = vadd.f32 %v759, %v812
        %v814 = vpop.f32.mrb[0].mxu0
        %815 = vdwg.mxu0
        %v816 = vmax.f32 %v802, 0.0
        %v817 = vmax.f32 %v805, 0.0
        %v818 = vmax.f32 %v810, 0.0
        %v819 = vmax.f32 %v813, 0.0
        %v820 = vpack.c.bf16 %v817, %v816
        %v821 = vpack.c.bf16 %v819, %v818
        %v822 = vld [vmem:[%s6] sm:$0xf]
        %v823 = vld [vmem:[%s6 + $0x4] sm:$0xf]
        %v824 = vld [vmem:[%s6 + $0x8] sm:$0xf]
        %v825 = vld [vmem:[%s6 + $0xc] sm:$0xf]
        %v826 = vld [vmem:[%s7] sm:$0x1]
        %v828 = vlaneseq
        %v829 = vshrl.u32 %v828, 7
        %v830 = vsub.s32 0, %v829
        %v831 = vrot.slane %v826, %v830
        %v837 = vunpack.c.l.b16 %v822
        %v838 = vunpack.c.l.b16 %v823
        %v839 = vunpack.c.l.b16 %v824
        %v840 = vunpack.c.l.b16 %v825
        %v841 = vpack.c.b16 %v838, %v837
        %v842 = vpack.c.b16 %v840, %v839
        %vm845 = vcmask 261120
        %v847 = vsel %vm845, %v820, 0
        %v850 = vsel %vm845, %v821, 0
        %852 = vmatprep.subr.bf16.mxu0 0
        %853 = vmatpush1.bf16.msra.mxu0 %v841
        %854 = vmatprep.subr.bf16.mxu0 0
        %855 = vmatpush1.bf16.msra.mxu0 %v842
        %856 = vmatprep.subr.bf16.mxu0 0
        %857 = vmatpush1.bf16.msra.mxu0 0
        %858 = vmatprep.subr.bf16.mxu0 0
        %859 = vmatpush1.bf16.msra.mxu0 0
        %860 = vmatprep.subr.bf16.mxu0 0
        %861 = vmatpush1.bf16.msra.mxu0 0
        %862 = vmatprep.subr.bf16.mxu0 0
        %863 = vmatpush1.bf16.msra.mxu0 0
        %864 = vmatprep.subr.bf16.mxu0 0
        %865 = vmatpush1.bf16.msra.mxu0 0
        %866 = vmatprep.subr.bf16.mxu0 0
        %867 = vmatpush1.bf16.msra.mxu0 0
        %868 = vmatprep.subr.bf16.mxu0 0
        %869 = vmatpush1.bf16.msra.mxu0 0
        %870 = vmatprep.subr.bf16.mxu0 0
        %871 = vmatpush1.bf16.msra.mxu0 0
        %872 = vmatprep.subr.bf16.mxu0 0
        %873 = vmatpush1.bf16.msra.mxu0 0
        %874 = vmatprep.subr.bf16.mxu0 0
        %875 = vmatpush1.bf16.msra.mxu0 0
        %876 = vmatprep.subr.bf16.mxu0 0
        %877 = vmatpush1.bf16.msra.mxu0 0
        %878 = vmatprep.subr.bf16.mxu0 0
        %879 = vmatpush1.bf16.msra.mxu0 0
        %880 = vmatprep.subr.bf16.mxu0 0
        %881 = vmatpush1.bf16.msra.mxu0 0
        %882 = vmatprep.subr.bf16.mxu0 0
        %883 = vmatpush1.bf16.msra.mxu0 0
        %884 = vmatprep.mubr.bf16.mxu0 0
        %885 = vmatmul.mubr.bf16.gmra.mrb[0].mxu0 %v847
        %v886 = vpop.f32.mrb[0].mxu0
        %v887 = vadd.f32 %v831, %v886
        %v888 = vpop.f32.mrb[0].mxu0
        %v889 = vpop.f32.mrb[0].mxu0
        %v890 = vadd.f32 %v831, %v889
        %v891 = vpop.f32.mrb[0].mxu0
        %892 = vmatprep.mubr.bf16.mxu0 0
        %893 = vmatmul.mubr.bf16.gmra.mrb[0].mxu0 %v850
        %v894 = vpop.f32.mrb[0].mxu0
        %v895 = vadd.f32 %v831, %v894
        %v896 = vpop.f32.mrb[0].mxu0
        %v897 = vpop.f32.mrb[0].mxu0
        %v898 = vadd.f32 %v831, %v897
        %v899 = vpop.f32.mrb[0].mxu0
        %900 = vdwg.mxu0
        %v901 = vmax.f32 %v887, 0.0
        %v902 = vmax.f32 %v890, 0.0
        %v903 = vmax.f32 %v895, 0.0
        %v904 = vmax.f32 %v898, 0.0
        %v905 = vpack.c.bf16 %v902, %v901
        %v906 = vpack.c.bf16 %v904, %v903
        %v909 = vunpack.c.l.b16 %v905
        %v910 = vunpack.c.h.b16 %v905
        %v911 = vunpack.c.l.b16 %v906
        %v912 = vunpack.c.h.b16 %v906
        %v913 = vpack.c.b16 %v909, %v909
        %v914 = vpack.c.b16 %v910, %v910
        %v915 = vpack.c.b16 %v911, %v911
        %v916 = vpack.c.b16 %v912, %v912
        %vm921 = vcmask 257024
        %922 = vst.msk [vmem:[%s570] sm:$0xf] %vm921, %v913
        %923 = vst.msk [vmem:[%s570 + $0x4] sm:$0xf] %vm921, %v914
        %924 = vst.msk [vmem:[%s570 + $0x8] sm:$0xf] %vm921, %v915
        %925 = vst.msk [vmem:[%s570 + $0xc] sm:$0xf] %vm921, %v916
        %v926 = vld [vmem:[%s551] sm:$0x1]
        %v927 = vlaneseq
        %v928 = vshrl.u32 %v927, 7
        %v929 = vlaneseq
        %v930 = vshrl.u32 %v929, 7
        %v931 = vsub.s32 0, %v930
        %v932 = vrot.slane %v926, %v931
        %vm933 = vcmp.eq.s32.totalorder %v928, %v932
        %v934 = vsel %vm933, 1, 0
        %v935 = vcvt.s32.f32 %v934
        %v936 = vpack.c.bf16 %v935, %v935
        %v937 = vld [vmem:[#allocation3] sm:$0xff]
        %v939 = vsel %vm845, %v936, 0
        %941 = vmatprep.subr.bf16.mxu0 0
        %942 = vmatpush1.bf16.msra.mxu0 %v905
        %943 = vmatprep.subr.bf16.mxu0 0
        %944 = vmatpush1.bf16.msra.mxu0 %v906
        %945 = vmatprep.subr.bf16.mxu0 0
        %946 = vmatpush1.bf16.msra.mxu0 0
        %947 = vmatprep.subr.bf16.mxu0 0
        %948 = vmatpush1.bf16.msra.mxu0 0
        %949 = vmatprep.subr.bf16.mxu0 0
        %950 = vmatpush1.bf16.msra.mxu0 0
        %951 = vmatprep.subr.bf16.mxu0 0
        %952 = vmatpush1.bf16.msra.mxu0 0
        %953 = vmatprep.subr.bf16.mxu0 0
        %954 = vmatpush1.bf16.msra.mxu0 0
        %955 = vmatprep.subr.bf16.mxu0 0
        %956 = vmatpush1.bf16.msra.mxu0 0
        %957 = vmatprep.subr.bf16.mxu0 0
        %958 = vmatpush1.bf16.msra.mxu0 0
        %959 = vmatprep.subr.bf16.mxu0 0
        %960 = vmatpush1.bf16.msra.mxu0 0
        %961 = vmatprep.subr.bf16.mxu0 0
        %962 = vmatpush1.bf16.msra.mxu0 0
        %963 = vmatprep.subr.bf16.mxu0 0
        %964 = vmatpush1.bf16.msra.mxu0 0
        %965 = vmatprep.subr.bf16.mxu0 0
        %966 = vmatpush1.bf16.msra.mxu0 0
        %967 = vmatprep.subr.bf16.mxu0 0
        %968 = vmatpush1.bf16.msra.mxu0 0
        %969 = vmatprep.subr.bf16.mxu0 0
        %970 = vmatpush1.bf16.msra.mxu0 0
        %971 = vmatprep.subr.bf16.mxu0 0
        %972 = vmatpush1.bf16.msra.mxu0 0
        %973 = vmatprep.mubr.bf16.mxu0 0
        %974 = vmatmul.mubr.bf16.gmra.mrb[0].mxu0 %v939
        %v975 = vpop.f32.mrb[0].mxu0
        %v976 = vadd.f32 0.0, %v975
        %v977 = vpop.f32.mrb[0].mxu0
        %v978 = vpop.f32.mrb[0].mxu0
        %v979 = vpop.f32.mrb[0].mxu0
        %980 = vdwg.mxu0
        %v981 = vadd.f32 %v937, %v976
        %982 = vst.msk [vmem:[#allocation3] sm:$0xff] %vm845, %v981
        %p983 = scmp.eq.s32.totalorder %s33, 1
        // Predicated region
        $region73: #{tpu_custom_call.1} parent=67 // pred_check
          %p984 = pneg %p983
        $region74: #{tpu_custom_call.1} parent=67 // pred_check_branch
          %986 = sbr.rel (%p984) target = $region76
        $region75: #{tpu_custom_call.1} parent=67 // pred_region
          %v987 = vld [vmem:[%s534] sm:$0xff]
          %v988 = vpack.c.bf16 %v987, %v987
          %v989 = vld [vmem:[#allocation3] sm:$0xff]
          %v990 = vpack.c.bf16 %v989, %v989
          %992 = vrot.lane.b32.xlu0 %v990, 32
          %v993 = vpop.permute.xlu0 %992
          %v996 = vsel %vm845, %v988, %v993
          %v997 = vld [vmem:[%s8] sm:$0xf]
          %v998 = vld [vmem:[%s8 + $0x4] sm:$0xf]
          %v999 = vld [vmem:[%s8 + $0x8] sm:$0xf]
          %v1000 = vld [vmem:[%s8 + $0xc] sm:$0xf]
          %v1001 = vld [vmem:[%s8 + $0x10] sm:$0xf]
          %v1002 = vld [vmem:[%s8 + $0x14] sm:$0xf]
          %v1003 = vld [vmem:[%s8 + $0x18] sm:$0xf]
          %v1004 = vld [vmem:[%s8 + $0x1c] sm:$0xf]
          %v1005 = vld [vmem:[%s9] sm:$0x1]
          %v1007 = vlaneseq
          %v1008 = vshrl.u32 %v1007, 7
          %v1009 = vsub.s32 0, %v1008
          %v1010 = vrot.slane %v1005, %v1009
          %v1020 = vunpack.c.l.b16 %v997
          %v1021 = vunpack.c.l.b16 %v998
          %v1022 = vunpack.c.l.b16 %v999
          %v1023 = vunpack.c.l.b16 %v1000
          %v1024 = vunpack.c.l.b16 %v1001
          %v1025 = vunpack.c.l.b16 %v1002
          %v1026 = vunpack.c.l.b16 %v1003
          %v1027 = vunpack.c.l.b16 %v1004
          %v1028 = vpack.c.b16 %v1021, %v1020
          %v1029 = vpack.c.b16 %v1023, %v1022
          %v1030 = vpack.c.b16 %v1025, %v1024
          %v1031 = vpack.c.b16 %v1027, %v1026
          %vm1036 = vcmask 523264
          %v1037 = vsel %vm1036, %v996, 0
          %1039 = vmatprep.subr.bf16.mxu0 0
          %1040 = vmatpush1.bf16.msra.mxu0 %v1028
          %1041 = vmatprep.subr.bf16.mxu0 0
          %1042 = vmatpush1.bf16.msra.mxu0 %v1029
          %1043 = vmatprep.subr.bf16.mxu0 0
          %1044 = vmatpush1.bf16.msra.mxu0 %v1030
          %1045 = vmatprep.subr.bf16.mxu0 0
          %1046 = vmatpush1.bf16.msra.mxu0 %v1031
          %1047 = vmatprep.subr.bf16.mxu0 0
          %1048 = vmatpush1.bf16.msra.mxu0 0
          %1049 = vmatprep.subr.bf16.mxu0 0
          %1050 = vmatpush1.bf16.msra.mxu0 0
          %1051 = vmatprep.subr.bf16.mxu0 0
          %1052 = vmatpush1.bf16.msra.mxu0 0
          %1053 = vmatprep.subr.bf16.mxu0 0
          %1054 = vmatpush1.bf16.msra.mxu0 0
          %1055 = vmatprep.subr.bf16.mxu0 0
          %1056 = vmatpush1.bf16.msra.mxu0 0
          %1057 = vmatprep.subr.bf16.mxu0 0
          %1058 = vmatpush1.bf16.msra.mxu0 0
          %1059 = vmatprep.subr.bf16.mxu0 0
          %1060 = vmatpush1.bf16.msra.mxu0 0
          %1061 = vmatprep.subr.bf16.mxu0 0
          %1062 = vmatpush1.bf16.msra.mxu0 0
          %1063 = vmatprep.subr.bf16.mxu0 0
          %1064 = vmatpush1.bf16.msra.mxu0 0
          %1065 = vmatprep.subr.bf16.mxu0 0
          %1066 = vmatpush1.bf16.msra.mxu0 0
          %1067 = vmatprep.subr.bf16.mxu0 0
          %1068 = vmatpush1.bf16.msra.mxu0 0
          %1069 = vmatprep.subr.bf16.mxu0 0
          %1070 = vmatpush1.bf16.msra.mxu0 0
          %1071 = vmatprep.mubr.bf16.mxu0 0
          %1072 = vmatmul.mubr.bf16.gmra.mrb[0].mxu0 %v1037
          %v1073 = vpop.f32.mrb[0].mxu0
          %v1074 = vadd.f32 %v1010, %v1073
          %v1075 = vpop.f32.mrb[0].mxu0
          %v1076 = vpop.f32.mrb[0].mxu0
          %v1077 = vpop.f32.mrb[0].mxu0
          %1078 = vdwg.mxu0
          %v1079 = vmax.f32 %v1074, 0.0
          %v1080 = vpack.c.bf16 %v1079, %v1079
          %v1081 = vld [vmem:[%s10] sm:$0xf]
          %v1082 = vld [vmem:[%s10 + $0x4] sm:$0xf]
          %v1083 = vld [vmem:[%s10 + $0x8] sm:$0xf]
          %v1084 = vld [vmem:[%s10 + $0xc] sm:$0xf]
          %v1085 = vld [vmem:[%s11] sm:$0x1]
          %v1087 = vlaneseq
          %v1088 = vshrl.u32 %v1087, 7
          %v1089 = vsub.s32 0, %v1088
          %v1090 = vrot.slane %v1085, %v1089
          %v1096 = vunpack.c.l.b16 %v1081
          %v1097 = vunpack.c.l.b16 %v1082
          %v1098 = vunpack.c.l.b16 %v1083
          %v1099 = vunpack.c.l.b16 %v1084
          %v1100 = vpack.c.b16 %v1097, %v1096
          %v1101 = vpack.c.b16 %v1099, %v1098
          %v1105 = vsel %vm845, %v1080, 0
          %1107 = vmatprep.subr.bf16.mxu0 0
          %1108 = vmatpush1.bf16.msra.mxu0 %v1100
          %1109 = vmatprep.subr.bf16.mxu0 0
          %1110 = vmatpush1.bf16.msra.mxu0 %v1101
          %1111 = vmatprep.subr.bf16.mxu0 0
          %1112 = vmatpush1.bf16.msra.mxu0 0
          %1113 = vmatprep.subr.bf16.mxu0 0
          %1114 = vmatpush1.bf16.msra.mxu0 0
          %1115 = vmatprep.subr.bf16.mxu0 0
          %1116 = vmatpush1.bf16.msra.mxu0 0
          %1117 = vmatprep.subr.bf16.mxu0 0
          %1118 = vmatpush1.bf16.msra.mxu0 0
          %1119 = vmatprep.subr.bf16.mxu0 0
          %1120 = vmatpush1.bf16.msra.mxu0 0
          %1121 = vmatprep.subr.bf16.mxu0 0
          %1122 = vmatpush1.bf16.msra.mxu0 0
          %1123 = vmatprep.subr.bf16.mxu0 0
          %1124 = vmatpush1.bf16.msra.mxu0 0
          %1125 = vmatprep.subr.bf16.mxu0 0
          %1126 = vmatpush1.bf16.msra.mxu0 0
          %1127 = vmatprep.subr.bf16.mxu0 0
          %1128 = vmatpush1.bf16.msra.mxu0 0
          %1129 = vmatprep.subr.bf16.mxu0 0
          %1130 = vmatpush1.bf16.msra.mxu0 0
          %1131 = vmatprep.subr.bf16.mxu0 0
          %1132 = vmatpush1.bf16.msra.mxu0 0
          %1133 = vmatprep.subr.bf16.mxu0 0
          %1134 = vmatpush1.bf16.msra.mxu0 0
          %1135 = vmatprep.subr.bf16.mxu0 0
          %1136 = vmatpush1.bf16.msra.mxu0 0
          %1137 = vmatprep.subr.bf16.mxu0 0
          %1138 = vmatpush1.bf16.msra.mxu0 0
          %1139 = vmatprep.mubr.bf16.mxu0 0
          %1140 = vmatmul.mubr.bf16.gmra.mrb[0].mxu0 %v1105
          %v1141 = vpop.f32.mrb[0].mxu0
          %v1142 = vadd.f32 %v1090, %v1141
          %v1143 = vpop.f32.mrb[0].mxu0
          %v1144 = vpop.f32.mrb[0].mxu0
          %v1145 = vpop.f32.mrb[0].mxu0
          %1146 = vdwg.mxu0
          %v1147 = vadd.f32 %v987, %v1142
          %1148 = vst.msk [vmem:[%s519] sm:$0xff] %vm845, %v1147
        $region76: #{tpu_custom_call.1} parent=67 // pred_fallthru
          _
        %s1149 = sand.u32 %s326, 1
        %s1150 = scalar_lea.sflag [#allocation5], %s1149
        %s1151 = sand.u32 %s326, 1
        %s1152 = smul.addr %s1151, 8
        %s1153 = scalar_lea.vmem [#allocation4], %s1152
        %s1154 = smul.u32 4, %s33
        %p1155 = scmp.lt.s32.totalorder %s32, 1
        %s1156 = scalar_select %p1155, %s32, 1
        %p1157 = scmp.lt.s32.totalorder %s1154, 7
        %s1158 = scalar_select %p1157, %s1154, 7
        %s1159 = smul.addr %s1156, 8
        %s1160 = sadd.s32 %s1158, %s1159
        %s1161 = smul.addr %s1160, 4
        %s1162 = scalar_lea.vmem %s13, %s1161
        // Predicated region
        $region77: #{tpu_custom_call.1} parent=67 // pred_check
          %p1163 = pneg %p336
        $region78: #{tpu_custom_call.1} parent=67 // pred_check_branch
          %1165 = sbr.rel (%p1163) target = $region80
        $region79: #{tpu_custom_call.1} parent=67 // pred_region
          %s1167 = ssub.s32 128, 128
          %1168 = vsyncadd %s1150, %s1167
          %s1169 = smul.addr %s32, 128
          %s1170 = scalar_lea.hbm %s12, %s1169
          %s1172 = sshll.u32 %s1153, 4
          %s1173 = int_to_ptr.vmem [resolvable:$true] %s1172
          %1175 = dma.vmem_to_hbm [thread:$0]  %s1173, 128, %s1170, %s1150
        $region80: #{tpu_custom_call.1} parent=67 // pred_fallthru
          _
        // Predicated region
        $region81: #{tpu_custom_call.1} parent=67 // pred_check
          %p1176 = pneg %p364
        $region82: #{tpu_custom_call.1} parent=67 // pred_check_branch
          %1178 = sbr.rel (%p1176) target = $region84
        $region83: #{tpu_custom_call.1} parent=67 // pred_region
          %s1179 = smul.u32 4, %s33
        $region84: #{tpu_custom_call.1} parent=67 // pred_fallthru
          _
      $region68: #{tpu_custom_call.1} parent=5 // pred_fallthru
        _
      %p1180 = scmp.le.s32.totalorder 2, %s23
      // Predicated region
      $region85: #{tpu_custom_call.1} parent=5 // pred_check
        %p1181 = pneg %p1180
      $region86: #{tpu_custom_call.1} parent=5 // pred_check_branch
        %1183 = sbr.rel (%p1181) target = $region88
      $region87: #{tpu_custom_call.1} parent=5 // pred_region
        %s1184 = ssub.s32 %s23, 2
        // Predicated region
        $region89: #{tpu_custom_call.1} parent=87 // pred_check
          %p1185 = pneg %p342
        $region90: #{tpu_custom_call.1} parent=87 // pred_check_branch
          %1187 = sbr.rel (%p1185) target = $region92
        $region91: #{tpu_custom_call.1} parent=87 // pred_region
          %s1188 = sand.u32 %s327, 1
          %s1189 = scalar_lea.sflag [#allocation5], %s1188
          %s1190 = sand.u32 %s327, 1
          %s1191 = smul.addr %s1190, 8
          %s1192 = scalar_lea.vmem [#allocation4], %s1191
          %1193 = dma.done %s1189, 128
        $region92: #{tpu_custom_call.1} parent=87 // pred_fallthru
          _
        // Predicated region
        $region93: #{tpu_custom_call.1} parent=87 // pred_check
          %p1194 = pneg %p370
        $region94: #{tpu_custom_call.1} parent=87 // pred_check_branch
          %1196 = sbr.rel (%p1194) target = $region96
        $region95: #{tpu_custom_call.1} parent=87 // pred_region
          %s1197 = smul.u32 4, %s35
          %p1198 = scmp.lt.s32.totalorder %s34, 1
          %s1199 = scalar_select %p1198, %s34, 1
          %p1200 = scmp.lt.s32.totalorder %s1197, 7
          %s1201 = scalar_select %p1200, %s1197, 7
          %s1202 = smul.addr %s1199, 8
          %s1203 = sadd.s32 %s1201, %s1202
          %s1204 = smul.addr %s1203, 4
          %s1205 = scalar_lea.vmem %s13, %s1204
        $region96: #{tpu_custom_call.1} parent=87 // pred_fallthru
          _
      $region88: #{tpu_custom_call.1} parent=5 // pred_fallthru
        _
    $region6: #{tpu_custom_call.1} parent=1 // loop_footer
      %s27 = sadd.s32 1, %s23
    $region7: #{tpu_custom_call.1} parent=1 // loop_footer_branch
      %22 = sbr.rel target = $region3
    $region8: #{tpu_custom_call.1} parent=1 // loop_exit
      _
    %1206 = vsyncpa [#allocation5], 1
    %s1207 = scalar_lea.sflag [#allocation5], 1
    %1208 = vsyncpa %s1207, 1

</llo_original>
